<compile_context>
chip_gen: v6e
topology: v6e:2x2x1
jax: 0.10.0
libtpu: 0.0.40
codegen_flags: <defaults>
</compile_context>

<pallas_src>
import functools

import jax
import jax.numpy as jnp
import numpy as np
from jax.experimental import pallas as pl
from jax.experimental.pallas import tpu as pltpu

DIM_X = 4
DIM_INPUT = DIM_X + 1     # X concat lamb
XPAD = 8                  # compact input width: [x0..x3, 1, 0, 0, 0]


def _round_up(n, m):
    return ((n + m - 1) // m) * m


def _cdiv(a, b):
    return -(-a // b)


def _nn_kernel(x_ref,
               w1a8_ref, w2a_ref, b2a_ref,
               w1b_ref, w1b8_ref, w2b_ref, b2b_ref,
               wout_ref, wout8_ref,
               o_ref, *, act_dtype):
    """One row tile of the full forward (2 RitzBlocks + output head).

    * The Premodel zero-pad is implicit: the activation entering block 1 is zero
      beyond column DIM_INPUT, so layer 1 only needs the K=8 matmul, and the x-pad
      residual reappears as extra K=8 matmuls downstream.
    * lamb and the pre-tanh biases b1a / b1b / bout are folded into row 4 of the
      small f32 weights (x8 column 4 is 1.0) -> only two bias adds remain.
    * Big matmul operands use the big-weight dtype (bf16 by default), f32 accumulate;
      tanh runs in act_dtype (bf16 halves EUP pushes on v6e/v7x).
    """
    wdt = w2a_ref.dtype                       # MXU operand dtype for the H x H dots
    x8 = x_ref[...]                           # (tm, 8) f32, incl. the 1.0 bias column

    def big_dot(a, w_ref):                    # MXU, f32 accumulation
        return jnp.dot(a, w_ref[...], preferred_element_type=jnp.float32)

    def small_dot(w8_ref):                    # K=8 f32 matmul (exact lamb/bias path)
        return jnp.dot(x8, w8_ref[...], preferred_element_type=jnp.float32)

    def act(pre):                             # tanh, then cast once for the next MXU op
        return jnp.tanh(pre.astype(act_dtype)).astype(wdt)

    # RitzBlock 1 (input zero beyond col 8 -> only the K=8 matmul; b1a + lamb folded in)
    h1 = act(small_dot(w1a8_ref))
    h2a = act(big_dot(h1, w2a_ref) + b2a_ref[...])
    # o1 = h2a + x_pad   (x_pad never materialized)

    # RitzBlock 2:  o1 @ W1b + b1b  ==  h2a @ W1b + x8 @ W1b8
    h1 = act(big_dot(h2a, w1b_ref) + small_dot(w1b8_ref))
    h2b = act(big_dot(h1, w2b_ref) + b2b_ref[...])
    # o2 = h2b + o1 = h2b + h2a + x_pad

    # Output head:  o2 @ Wout + bout  ==  (h2b + h2a) @ Wout + x8 @ Wout8
    out = big_dot(h2b + h2a, wout_ref) + small_dot(wout8_ref)
    o_ref[...] = out.astype(o_ref.dtype)


def neural_networks_forward(X, lamb, params, *, tile_rows=1024,
                            weight_dtype=jnp.bfloat16, act_dtype=None):
    """X: (..., 4) float32, lamb: scalar.  Returns (..., 4) float32.

    weight_dtype: MXU operand dtype for the H x H matmuls (bf16 default; f32 = exact).
    act_dtype:    dtype for tanh / residual chain (default = weight_dtype).  On v5e
                  (no bf16 VPU/EUP) pass jnp.float32 to avoid emulated bf16 elementwise.
    tile_rows:    row tile; sweep {512, 1024, 2048} at large batch.
    """
    if act_dtype is None:
        act_dtype = weight_dtype
    f32 = jnp.float32

    n_hid = params["W1a"].shape[0]
    Hp = _round_up(max(n_hid, XPAD), 128)        # 200 -> 256, MXU-aligned
    lead_shape = X.shape[:-1]
    rows = int(np.prod(lead_shape)) if lead_shape else 1

    # Row tiling: big tiles amortize the ~0.35 us per-grid-step overhead, but keep
    # >= 2 grid steps so both v7x TensorCores get work ("parallel" grid axis).
    # The last tile may be ragged: Pallas pads the read / masks the write, so no
    # host-side row-padding pass over HBM and no wasted full-tile compute.
    tile_rows = max(8, (int(tile_rows) // 8) * 8)
    tm = max(8, min(tile_rows, _round_up(_cdiv(rows, 2), 8)))
    grid = (_cdiv(rows, tm),)

    # Compact input [x0..x3, 1, 0, 0, 0]; the 1.0 column carries the folded biases.
    x = X.reshape(rows, DIM_X).astype(f32)
    x8 = jnp.concatenate(
        [x, jnp.ones((rows, 1), f32), jnp.zeros((rows, XPAD - DIM_INPUT), f32)],
        axis=-1)

    # ---- parameter prep (exact: zero padding + scalar folds, done in f32) --------
    def pad2(w, r, c, dtype):
        w = w.astype(f32)
        return jnp.pad(w, ((0, r - w.shape[0]), (0, c - w.shape[1]))).astype(dtype)

    def fold8(W, b, cols):
        # rows 0..3 = W[:4, :];  row 4 = lamb*W[4, :] + b  (lamb column + pre-tanh
        # bias folded);  rows 5..7 = 0.  Kept f32 so the lamb/bias path is exact.
        W = W.astype(f32)
        W8 = jnp.concatenate(
            [W[:DIM_X, :],
             lamb * W[DIM_X:DIM_INPUT, :] + b.astype(f32),
             jnp.zeros((XPAD - DIM_INPUT, W.shape[1]), f32)], axis=0)
        return jnp.pad(W8, ((0, 0), (0, cols - W.shape[1])))

    W1a8 = fold8(params["W1a"], params["b1a"], Hp)          # (8, Hp)   f32
    W1b8 = fold8(params["W1b"], params["b1b"], Hp)          # (8, Hp)   f32
    Wout8 = fold8(params["Wout"], params["bout"], DIM_X)    # (8, 4)    f32
    W2a = pad2(params["W2a"], Hp, Hp, weight_dtype)         # (Hp, Hp)
    W1b = pad2(params["W1b"], Hp, Hp, weight_dtype)
    W2b = pad2(params["W2b"], Hp, Hp, weight_dtype)
    Wout = pad2(params["Wout"], Hp, DIM_X, weight_dtype)    # (Hp, 4)
    b2a = pad2(params["b2a"], 1, Hp, f32)                   # (1, Hp)   f32
    b2b = pad2(params["b2b"], 1, Hp, f32)

    act_spec = pl.BlockSpec((tm, XPAD), lambda i: (i, 0))
    out_spec = pl.BlockSpec((tm, DIM_X), lambda i: (i, 0))   # 16 B/row writeback
    # Constant index_map -> block never changes across the grid, so the weights stay
    # VMEM-resident (~0.5 MiB bf16 at Hp=256), far under the scoped limit everywhere.
    const = lambda shape: pl.BlockSpec(shape, lambda i: (0,) * len(shape))

    out_flat = pl.pallas_call(
        functools.partial(_nn_kernel, act_dtype=act_dtype),
        out_shape=jax.ShapeDtypeStruct((rows, DIM_X), f32),
        grid_spec=pltpu.PrefetchScalarGridSpec(
            num_scalar_prefetch=0,
            grid=grid,
            in_specs=[
                act_spec,
                const((XPAD, Hp)),                          # W1a8 (b1a + lamb folded)
                const((Hp, Hp)), const((1, Hp)),            # W2a, b2a
                const((Hp, Hp)), const((XPAD, Hp)),         # W1b, W1b8 (b1b + lamb)
                const((Hp, Hp)), const((1, Hp)),            # W2b, b2b
                const((Hp, DIM_X)), const((XPAD, DIM_X)),   # Wout, Wout8 (bout + lamb)
            ],
            out_specs=out_spec,
        ),
        compiler_params=pltpu.CompilerParams(
            dimension_semantics=("parallel",)),
    )(x8, W1a8, W2a, b2a, W1b, W1b8, W2b, b2b, Wout, Wout8)

    return out_flat.reshape(lead_shape + (DIM_X,))


def reference_forward(X, lamb, params):
    """Pure-JAX reference mirroring the PyTorch forward (unpadded, f32)."""
    n_hid = params["W1a"].shape[0]
    lead_shape = X.shape[:-1]
    lamb_col = jnp.full(lead_shape + (1,), lamb, dtype=X.dtype)
    XX = jnp.concatenate([X, lamb_col], axis=-1)
    o = jnp.pad(XX, [(0, 0)] * len(lead_shape) + [(0, n_hid - DIM_INPUT)])
    for blk in ("a", "b"):
        h1 = jnp.tanh(o @ params[f"W1{blk}"] + params[f"b1{blk}"])
        h2 = jnp.tanh(h1 @ params[f"W2{blk}"] + params[f"b2{blk}"])
        o = h2 + o
    return o @ params["Wout"] + params["bout"]


def init_params(key, n_hid):
    # NOTE: the PyTorch module initializes everything to zeros; here we use
    # deterministic small random values so the kernel exercises real compute.
    keys = jax.random.split(key, 10)
    s = 0.05
    return {
        "W1a": s * jax.random.normal(keys[0], (n_hid, n_hid), jnp.float32),
        "b1a": s * jax.random.normal(keys[1], (1, n_hid), jnp.float32),
        "W2a": s * jax.random.normal(keys[2], (n_hid, n_hid), jnp.float32),
        "b2a": s * jax.random.normal(keys[3], (1, n_hid), jnp.float32),
        "W1b": s * jax.random.normal(keys[4], (n_hid, n_hid), jnp.float32),
        "b1b": s * jax.random.normal(keys[5], (1, n_hid), jnp.float32),
        "W2b": s * jax.random.normal(keys[6], (n_hid, n_hid), jnp.float32),
        "b2b": s * jax.random.normal(keys[7], (1, n_hid), jnp.float32),
        "Wout": s * jax.random.normal(keys[8], (n_hid, DIM_X), jnp.float32),
        "bout": s * jax.random.normal(keys[9], (1, DIM_X), jnp.float32),
    }


if __name__ == "__main__":
    key = jax.random.PRNGKey(0)
    k_param, k_x = jax.random.split(key)

    n_hid = 200            # module default (padded to 256 inside the wrapper)
    T, B = 30, 11          # non-tile-multiple row count (330 rows, ragged last tile)
    lamb = -10.0

    params = init_params(k_param, n_hid)
    X = jax.random.normal(k_x, (T, B, DIM_X), jnp.float32)

    ref = jax.block_until_ready(reference_forward(X, lamb, params))

    # Exact-math configuration (f32 MXU operands + f32 tanh): tight correctness check.
    out_f32 = jax.block_until_ready(
        neural_networks_forward(X, lamb, params, weight_dtype=jnp.float32))
    assert out_f32.shape == (T, B, DIM_X)
    assert np.allclose(np.asarray(out_f32), np.asarray(ref), atol=1e-4, rtol=1e-4)

    # Default fast configuration (bf16 MXU operands + bf16 tanh, f32 accumulation):
    # loose tolerance against the f32 reference.
    out_bf16 = jax.block_until_ready(neural_networks_forward(X, lamb, params))
    assert out_bf16.shape == (T, B, DIM_X)
    assert np.allclose(np.asarray(out_bf16), np.asarray(ref), atol=5e-2, rtol=5e-2)

    # TODO(synk): ActiveWork / GirsanovWeight / Loss are training-time trajectory
    # reductions, not part of forward(); left in plain JAX (not implemented here).
    print("KERNEL_OK")
</pallas_src>

<mosaic_0001>
module attributes {stable_mosaic.version = 11 : i64} {
  func.func @_nn_kernel(%arg0: i32, %arg1: memref<168x8xf32, #tpu.memory_space<vmem>>, %arg2: memref<8x256xf32, #tpu.memory_space<vmem>>, %arg3: memref<256x256xf32, #tpu.memory_space<vmem>>, %arg4: memref<1x256xf32, #tpu.memory_space<vmem>>, %arg5: memref<256x256xf32, #tpu.memory_space<vmem>>, %arg6: memref<8x256xf32, #tpu.memory_space<vmem>>, %arg7: memref<256x256xf32, #tpu.memory_space<vmem>>, %arg8: memref<1x256xf32, #tpu.memory_space<vmem>>, %arg9: memref<256x4xf32, #tpu.memory_space<vmem>>, %arg10: memref<8x4xf32, #tpu.memory_space<vmem>>, %arg11: memref<168x4xf32, #tpu.memory_space<vmem>>) attributes {dimension_semantics = [#tpu.dimension_semantics<parallel>], iteration_bounds = array<i64: 2>, scalar_prefetch = 0 : i64, scratch_operands = 0 : i64, tpu.core_type = #tpu.core_type<tc>, window_params = [{transform_indices = @transform_0, window_bounds = array<i64: 168, 8>}, {pipeline_mode = #tpu.pipeline_mode<synchronous>, transform_indices = @transform_1, window_bounds = array<i64: 8, 256>}, {pipeline_mode = #tpu.pipeline_mode<synchronous>, transform_indices = @transform_2, window_bounds = array<i64: 256, 256>}, {pipeline_mode = #tpu.pipeline_mode<synchronous>, transform_indices = @transform_3, window_bounds = array<i64: 1, 256>}, {pipeline_mode = #tpu.pipeline_mode<synchronous>, transform_indices = @transform_4, window_bounds = array<i64: 256, 256>}, {pipeline_mode = #tpu.pipeline_mode<synchronous>, transform_indices = @transform_5, window_bounds = array<i64: 8, 256>}, {pipeline_mode = #tpu.pipeline_mode<synchronous>, transform_indices = @transform_6, window_bounds = array<i64: 256, 256>}, {pipeline_mode = #tpu.pipeline_mode<synchronous>, transform_indices = @transform_7, window_bounds = array<i64: 1, 256>}, {pipeline_mode = #tpu.pipeline_mode<synchronous>, transform_indices = @transform_8, window_bounds = array<i64: 256, 4>}, {pipeline_mode = #tpu.pipeline_mode<synchronous>, transform_indices = @transform_9, window_bounds = array<i64: 8, 4>}, {transform_indices = @transform_10, window_bounds = array<i64: 168, 4>}]} {
    %c0 = arith.constant 0 : index
    %c0_0 = arith.constant 0 : index
    %0 = vector.load %arg1[%c0, %c0_0] : memref<168x8xf32, #tpu.memory_space<vmem>>, vector<168x8xf32>
    %c0_1 = arith.constant 0 : index
    %c0_2 = arith.constant 0 : index
    %1 = vector.load %arg2[%c0_1, %c0_2] : memref<8x256xf32, #tpu.memory_space<vmem>>, vector<8x256xf32>
    %cst = arith.constant dense<0.000000e+00> : vector<168x256xf32>
    %2 = tpu.matmul %0, %1, %cst {dimension_numbers = #tpu.dot_dimension_numbers<[1], [0], [0], [1], [0, 0, 1, 1], [], []>} : vector<168x8xf32>, vector<8x256xf32>, vector<168x256xf32> -> vector<168x256xf32>
    %3 = math.tanh %2 : vector<168x256xf32>
    %c0_3 = arith.constant 0 : index
    %c0_4 = arith.constant 0 : index
    %4 = vector.load %arg3[%c0_3, %c0_4] : memref<256x256xf32, #tpu.memory_space<vmem>>, vector<256x256xf32>
    %cst_5 = arith.constant dense<0.000000e+00> : vector<168x256xf32>
    %5 = tpu.matmul %3, %4, %cst_5 {dimension_numbers = #tpu.dot_dimension_numbers<[1], [0], [0], [1], [0, 0, 1, 1], [], []>} : vector<168x256xf32>, vector<256x256xf32>, vector<168x256xf32> -> vector<168x256xf32>
    %c0_6 = arith.constant 0 : index
    %c0_7 = arith.constant 0 : index
    %6 = vector.load %arg4[%c0_6, %c0_7] : memref<1x256xf32, #tpu.memory_space<vmem>>, vector<1x256xf32>
    %7 = vector.broadcast %6 : vector<1x256xf32> to vector<168x256xf32>
    %8 = arith.addf %5, %7 : vector<168x256xf32>
    %9 = math.tanh %8 : vector<168x256xf32>
    %c0_8 = arith.constant 0 : index
    %c0_9 = arith.constant 0 : index
    %10 = vector.load %arg5[%c0_8, %c0_9] : memref<256x256xf32, #tpu.memory_space<vmem>>, vector<256x256xf32>
    %cst_10 = arith.constant dense<0.000000e+00> : vector<168x256xf32>
    %11 = tpu.matmul %9, %10, %cst_10 {dimension_numbers = #tpu.dot_dimension_numbers<[1], [0], [0], [1], [0, 0, 1, 1], [], []>} : vector<168x256xf32>, vector<256x256xf32>, vector<168x256xf32> -> vector<168x256xf32>
    %c0_11 = arith.constant 0 : index
    %c0_12 = arith.constant 0 : index
    %12 = vector.load %arg6[%c0_11, %c0_12] : memref<8x256xf32, #tpu.memory_space<vmem>>, vector<8x256xf32>
    %cst_13 = arith.constant dense<0.000000e+00> : vector<168x256xf32>
    %13 = tpu.matmul %0, %12, %cst_13 {dimension_numbers = #tpu.dot_dimension_numbers<[1], [0], [0], [1], [0, 0, 1, 1], [], []>} : vector<168x8xf32>, vector<8x256xf32>, vector<168x256xf32> -> vector<168x256xf32>
    %14 = arith.addf %11, %13 : vector<168x256xf32>
    %15 = math.tanh %14 : vector<168x256xf32>
    %c0_14 = arith.constant 0 : index
    %c0_15 = arith.constant 0 : index
    %16 = vector.load %arg7[%c0_14, %c0_15] : memref<256x256xf32, #tpu.memory_space<vmem>>, vector<256x256xf32>
    %cst_16 = arith.constant dense<0.000000e+00> : vector<168x256xf32>
    %17 = tpu.matmul %15, %16, %cst_16 {dimension_numbers = #tpu.dot_dimension_numbers<[1], [0], [0], [1], [0, 0, 1, 1], [], []>} : vector<168x256xf32>, vector<256x256xf32>, vector<168x256xf32> -> vector<168x256xf32>
    %c0_17 = arith.constant 0 : index
    %c0_18 = arith.constant 0 : index
    %18 = vector.load %arg8[%c0_17, %c0_18] : memref<1x256xf32, #tpu.memory_space<vmem>>, vector<1x256xf32>
    %19 = vector.broadcast %18 : vector<1x256xf32> to vector<168x256xf32>
    %20 = arith.addf %17, %19 : vector<168x256xf32>
    %21 = math.tanh %20 : vector<168x256xf32>
    %22 = arith.addf %21, %9 : vector<168x256xf32>
    %c0_19 = arith.constant 0 : index
    %c0_20 = arith.constant 0 : index
    %23 = vector.load %arg9[%c0_19, %c0_20] : memref<256x4xf32, #tpu.memory_space<vmem>>, vector<256x4xf32>
    %cst_21 = arith.constant dense<0.000000e+00> : vector<168x4xf32>
    %24 = tpu.matmul %22, %23, %cst_21 {dimension_numbers = #tpu.dot_dimension_numbers<[1], [0], [0], [1], [0, 0, 1, 1], [], []>} : vector<168x256xf32>, vector<256x4xf32>, vector<168x4xf32> -> vector<168x4xf32>
    %c0_22 = arith.constant 0 : index
    %c0_23 = arith.constant 0 : index
    %25 = vector.load %arg10[%c0_22, %c0_23] : memref<8x4xf32, #tpu.memory_space<vmem>>, vector<8x4xf32>
    %cst_24 = arith.constant dense<0.000000e+00> : vector<168x4xf32>
    %26 = tpu.matmul %0, %25, %cst_24 {dimension_numbers = #tpu.dot_dimension_numbers<[1], [0], [0], [1], [0, 0, 1, 1], [], []>} : vector<168x8xf32>, vector<8x4xf32>, vector<168x4xf32> -> vector<168x4xf32>
    %27 = arith.addf %24, %26 : vector<168x4xf32>
    %c0_25 = arith.constant 0 : index
    %c0_26 = arith.constant 0 : index
    %28 = vector.load %arg11[%c0_25, %c0_26] : memref<168x4xf32, #tpu.memory_space<vmem>>, vector<168x4xf32>
    tpu.vector_store %arg11[%c0_25, %c0_26], %27 {strides = array<i32>} : memref<168x4xf32, #tpu.memory_space<vmem>>, vector<168x4xf32>,
    return
  }
  func.func @transform_0(%arg0: i32) -> (i32, i32) {
    %c0_i32 = arith.constant 0 : i32
    %c0_i32_0 = arith.constant 0 : i32
    return %arg0, %c0_i32 : i32, i32
  }
  func.func @transform_1(%arg0: i32) -> (i32, i32) {
    %c0_i32 = arith.constant 0 : i32
    %c0_i32_0 = arith.constant 0 : i32
    %c0_i32_1 = arith.constant 0 : i32
    return %c0_i32, %c0_i32_0 : i32, i32
  }
  func.func @transform_2(%arg0: i32) -> (i32, i32) {
    %c0_i32 = arith.constant 0 : i32
    %c0_i32_0 = arith.constant 0 : i32
    %c0_i32_1 = arith.constant 0 : i32
    return %c0_i32, %c0_i32_0 : i32, i32
  }
  func.func @transform_3(%arg0: i32) -> (i32, i32) {
    %c0_i32 = arith.constant 0 : i32
    %c0_i32_0 = arith.constant 0 : i32
    %c0_i32_1 = arith.constant 0 : i32
    return %c0_i32, %c0_i32_0 : i32, i32
  }
  func.func @transform_4(%arg0: i32) -> (i32, i32) {
    %c0_i32 = arith.constant 0 : i32
    %c0_i32_0 = arith.constant 0 : i32
    %c0_i32_1 = arith.constant 0 : i32
    return %c0_i32, %c0_i32_0 : i32, i32
  }
  func.func @transform_5(%arg0: i32) -> (i32, i32) {
    %c0_i32 = arith.constant 0 : i32
    %c0_i32_0 = arith.constant 0 : i32
    %c0_i32_1 = arith.constant 0 : i32
    return %c0_i32, %c0_i32_0 : i32, i32
  }
  func.func @transform_6(%arg0: i32) -> (i32, i32) {
    %c0_i32 = arith.constant 0 : i32
    %c0_i32_0 = arith.constant 0 : i32
    %c0_i32_1 = arith.constant 0 : i32
    return %c0_i32, %c0_i32_0 : i32, i32
  }
  func.func @transform_7(%arg0: i32) -> (i32, i32) {
    %c0_i32 = arith.constant 0 : i32
    %c0_i32_0 = arith.constant 0 : i32
    %c0_i32_1 = arith.constant 0 : i32
    return %c0_i32, %c0_i32_0 : i32, i32
  }
  func.func @transform_8(%arg0: i32) -> (i32, i32) {
    %c0_i32 = arith.constant 0 : i32
    %c0_i32_0 = arith.constant 0 : i32
    %c0_i32_1 = arith.constant 0 : i32
    return %c0_i32, %c0_i32_0 : i32, i32
  }
  func.func @transform_9(%arg0: i32) -> (i32, i32) {
    %c0_i32 = arith.constant 0 : i32
    %c0_i32_0 = arith.constant 0 : i32
    %c0_i32_1 = arith.constant 0 : i32
    return %c0_i32, %c0_i32_0 : i32, i32
  }
  func.func @transform_10(%arg0: i32) -> (i32, i32) {
    %c0_i32 = arith.constant 0 : i32
    %c0_i32_0 = arith.constant 0 : i32
    return %arg0, %c0_i32 : i32, i32
  }
}

</mosaic_0001>

<llo_original>
// kernel: tpu_custom_call.1
$region0: #{tpu_custom_call.1}
  #allocation0 [shape = 'u32[]', space=smem, size = 0x4, offset = 0x4, fixed_abs, tag = 'smem constant byte address 0x4 - core index']
  #allocation1 [shape = 'u32[144,128]{1,0:T(1,128)}', space=vmem, size = 0x12000, scoped, tag = 'internal scratch']
  %s0 = inlined_call_operand.vmem [shape: f32[330,8], index: 0, kind: input, shape index: {}]
  %s1 = inlined_call_operand.vmem [shape: f32[8,256], index: 1, kind: input, shape index: {}]
  %s2 = inlined_call_operand.vmem [shape: f32[256,256], index: 2, kind: input, shape index: {}]
  %s3 = inlined_call_operand.vmem [shape: f32[1,256], index: 3, kind: input, shape index: {}]
  %s4 = inlined_call_operand.hbm [shape: f32[256,256], index: 4, kind: input, shape index: {}]
  %s5 = inlined_call_operand.vmem [shape: f32[8,256], index: 5, kind: input, shape index: {}]
  %s6 = inlined_call_operand.hbm [shape: f32[256,256], index: 6, kind: input, shape index: {}]
  %s7 = inlined_call_operand.vmem [shape: f32[1,256], index: 7, kind: input, shape index: {}]
  %s8 = inlined_call_operand.vmem [shape: f32[256,4], index: 8, kind: input, shape index: {}]
  %s9 = inlined_call_operand.vmem [shape: f32[8,4], index: 9, kind: input, shape index: {}]
  %s10 = inlined_call_operand.vmem [shape: f32[330,4], index: 10, kind: output, shape index: {}]
  %s11 = sld [smem:[#allocation0]]
  $region81: #{tpu_custom_call.1} parent=0
    _
  %s13 = ssub.s32 1, %s11
  %s14 = scalar_select 0, %s13, %s11
  $region1: #{tpu_custom_call.1} parent=0
    #allocation2 [shape = 'u8[262144]{0}', space=vmem, size = 0x40000, scoped, tag = 'input window, operand 4, single buffered']
    #allocation3 [shape = 's32[2]{0}', space=sflag, size = 0x8, scoped, tag = 'scoped memory for tpu_custom_call.1']
    #allocation4 [shape = 'u8[262144]{0}', space=vmem, size = 0x40000, scoped, tag = 'input window, operand 6, single buffered']
    #allocation5 [shape = 's32[1]{0}', space=sflag, size = 0x4, scoped, tag = 'scoped memory for tpu_custom_call.1']
    %15 = vsyncpa [#allocation3], 0
    %16 = vsyncpa [#allocation5], 0
    loop: start=0, step=1, limit=4
    $region2: #{tpu_custom_call.1} parent=1 // loop_pre_header
      _
    $region3: #{tpu_custom_call.1} parent=1 // loop_header
      %s18 = sphi 0, %s22
      %p19 = scmp.ge.s32.totalorder %s18, 4
      %s28 = sphi 0, %s30
      %s31 = sphi 0, %s28
      %s32 = sphi 0, %s31
      %s48 = sphi 0, %s32
      %s52 = sphi 0, %s52
      %s54 = sphi 0, %s52
      %s55 = sphi 0, %s54
      %s69 = sphi 0, %s55
      %s73 = sphi 0, %s73
      %s75 = sphi 0, %s73
      %s76 = sphi 0, %s75
      %s90 = sphi 0, %s76
      %s94 = sphi 0, %s94
      %s96 = sphi 0, %s94
      %s97 = sphi 0, %s96
      %s111 = sphi 0, %s97
      %s115 = sphi 0, %s115
      %s117 = sphi 0, %s115
      %s118 = sphi 0, %s117
      %s132 = sphi 0, %s118
      %s136 = sphi 0, %s136
      %s138 = sphi 0, %s136
      %s139 = sphi 0, %s138
      %s153 = sphi 0, %s139
      %s157 = sphi 0, %s157
      %s159 = sphi 0, %s157
      %s160 = sphi 0, %s159
      %s174 = sphi 0, %s160
      %s178 = sphi 0, %s178
      %s180 = sphi 0, %s178
      %s181 = sphi 0, %s180
      %s195 = sphi 0, %s181
      %s199 = sphi 0, %s199
      %s201 = sphi 0, %s199
      %s202 = sphi 0, %s201
      %s216 = sphi 0, %s202
      %s220 = sphi 0, %s220
      %s222 = sphi 0, %s220
      %s223 = sphi 0, %s222
      %s237 = sphi 0, %s223
      %s243 = sphi 0, %s245
      %s246 = sphi 0, %s243
      %s247 = sphi 0, %s246
      %s263 = sphi 0, %s247
    $region4: #{tpu_custom_call.1} parent=1 // loop_header_branch
      %21 = sbr.rel (%p19) target = $region8
    $region5: #{tpu_custom_call.1} parent=1 // loop_body
      %s23 = ssub.s32 %s18, 1
      %s24 = ssub.s32 %s18, 2
      %s25 = sadd.s32 %s18, 1
      %s26 = ssub.s32 %s18, %s25
      %p27 = scmp.eq.s32.totalorder %s26, 0
      %s29 = sadd.s32 %s28, 1
      %s30 = scalar_select %p27, %s28, %s29
      %p33 = pneg %p27
      %p34 = scmp.eq.s32.totalorder %s18, 1
      %p35 = por %p33, %p34
      %p36 = scmp.ne.s32.totalorder %s28, %s31
      %p37 = scmp.eq.s32.totalorder %s18, 0
      %p38 = por %p36, %p37
      %p39 = scmp.ne.s32.totalorder %s28, %s31
      %p40 = scmp.eq.s32.totalorder %s23, 1
      %p41 = por %p39, %p40
      %p42 = scmp.ne.s32.totalorder %s31, %s32
      %p43 = scmp.eq.s32.totalorder %s23, 0
      %p44 = por %p42, %p43
      %p45 = scmp.ne.s32.totalorder %s31, %s32
      %p46 = scmp.eq.s32.totalorder %s24, 1
      %p47 = por %p45, %p46
      %p49 = scmp.ne.s32.totalorder %s32, %s48
      %p50 = scmp.eq.s32.totalorder %s24, 0
      %p51 = por %p49, %p50
      %s53 = sadd.s32 %s52, 1
      %p56 = scmp.eq.s32.totalorder %s18, 1
      %p57 = scmp.ne.s32.totalorder %s52, %s54
      %p58 = scmp.eq.s32.totalorder %s18, 0
      %p59 = por %p57, %p58
      %p60 = scmp.ne.s32.totalorder %s52, %s54
      %p61 = scmp.eq.s32.totalorder %s23, 1
      %p62 = por %p60, %p61
      %p63 = scmp.ne.s32.totalorder %s54, %s55
      %p64 = scmp.eq.s32.totalorder %s23, 0
      %p65 = por %p63, %p64
      %p66 = scmp.ne.s32.totalorder %s54, %s55
      %p67 = scmp.eq.s32.totalorder %s24, 1
      %p68 = por %p66, %p67
      %p70 = scmp.ne.s32.totalorder %s55, %s69
      %p71 = scmp.eq.s32.totalorder %s24, 0
      %p72 = por %p70, %p71
      %s74 = sadd.s32 %s73, 1
      %p77 = scmp.eq.s32.totalorder %s18, 1
      %p78 = scmp.ne.s32.totalorder %s73, %s75
      %p79 = scmp.eq.s32.totalorder %s18, 0
      %p80 = por %p78, %p79
      %p81 = scmp.ne.s32.totalorder %s73, %s75
      %p82 = scmp.eq.s32.totalorder %s23, 1
      %p83 = por %p81, %p82
      %p84 = scmp.ne.s32.totalorder %s75, %s76
      %p85 = scmp.eq.s32.totalorder %s23, 0
      %p86 = por %p84, %p85
      %p87 = scmp.ne.s32.totalorder %s75, %s76
      %p88 = scmp.eq.s32.totalorder %s24, 1
      %p89 = por %p87, %p88
      %p91 = scmp.ne.s32.totalorder %s76, %s90
      %p92 = scmp.eq.s32.totalorder %s24, 0
      %p93 = por %p91, %p92
      %s95 = sadd.s32 %s94, 1
      %p98 = scmp.eq.s32.totalorder %s18, 1
      %p99 = scmp.ne.s32.totalorder %s94, %s96
      %p100 = scmp.eq.s32.totalorder %s18, 0
      %p101 = por %p99, %p100
      %p102 = scmp.ne.s32.totalorder %s94, %s96
      %p103 = scmp.eq.s32.totalorder %s23, 1
      %p104 = por %p102, %p103
      %p105 = scmp.ne.s32.totalorder %s96, %s97
      %p106 = scmp.eq.s32.totalorder %s23, 0
      %p107 = por %p105, %p106
      %p108 = scmp.ne.s32.totalorder %s96, %s97
      %p109 = scmp.eq.s32.totalorder %s24, 1
      %p110 = por %p108, %p109
      %p112 = scmp.ne.s32.totalorder %s97, %s111
      %p113 = scmp.eq.s32.totalorder %s24, 0
      %p114 = por %p112, %p113
      %s116 = sadd.s32 %s115, 1
      %p119 = scmp.eq.s32.totalorder %s18, 1
      %p120 = scmp.ne.s32.totalorder %s115, %s117
      %p121 = scmp.eq.s32.totalorder %s18, 0
      %p122 = por %p120, %p121
      %p123 = scmp.ne.s32.totalorder %s115, %s117
      %p124 = scmp.eq.s32.totalorder %s23, 1
      %p125 = por %p123, %p124
      %p126 = scmp.ne.s32.totalorder %s117, %s118
      %p127 = scmp.eq.s32.totalorder %s23, 0
      %p128 = por %p126, %p127
      %p129 = scmp.ne.s32.totalorder %s117, %s118
      %p130 = scmp.eq.s32.totalorder %s24, 1
      %p131 = por %p129, %p130
      %p133 = scmp.ne.s32.totalorder %s118, %s132
      %p134 = scmp.eq.s32.totalorder %s24, 0
      %p135 = por %p133, %p134
      %s137 = sadd.s32 %s136, 1
      %p140 = scmp.eq.s32.totalorder %s18, 1
      %p141 = scmp.ne.s32.totalorder %s136, %s138
      %p142 = scmp.eq.s32.totalorder %s18, 0
      %p143 = por %p141, %p142
      %p144 = scmp.ne.s32.totalorder %s136, %s138
      %p145 = scmp.eq.s32.totalorder %s23, 1
      %p146 = por %p144, %p145
      %p147 = scmp.ne.s32.totalorder %s138, %s139
      %p148 = scmp.eq.s32.totalorder %s23, 0
      %p149 = por %p147, %p148
      %p150 = scmp.ne.s32.totalorder %s138, %s139
      %p151 = scmp.eq.s32.totalorder %s24, 1
      %p152 = por %p150, %p151
      %p154 = scmp.ne.s32.totalorder %s139, %s153
      %p155 = scmp.eq.s32.totalorder %s24, 0
      %p156 = por %p154, %p155
      %s158 = sadd.s32 %s157, 1
      %p161 = scmp.eq.s32.totalorder %s18, 1
      %p162 = scmp.ne.s32.totalorder %s157, %s159
      %p163 = scmp.eq.s32.totalorder %s18, 0
      %p164 = por %p162, %p163
      %p165 = scmp.ne.s32.totalorder %s157, %s159
      %p166 = scmp.eq.s32.totalorder %s23, 1
      %p167 = por %p165, %p166
      %p168 = scmp.ne.s32.totalorder %s159, %s160
      %p169 = scmp.eq.s32.totalorder %s23, 0
      %p170 = por %p168, %p169
      %p171 = scmp.ne.s32.totalorder %s159, %s160
      %p172 = scmp.eq.s32.totalorder %s24, 1
      %p173 = por %p171, %p172
      %p175 = scmp.ne.s32.totalorder %s160, %s174
      %p176 = scmp.eq.s32.totalorder %s24, 0
      %p177 = por %p175, %p176
      %s179 = sadd.s32 %s178, 1
      %p182 = scmp.eq.s32.totalorder %s18, 1
      %p183 = scmp.ne.s32.totalorder %s178, %s180
      %p184 = scmp.eq.s32.totalorder %s18, 0
      %p185 = por %p183, %p184
      %p186 = scmp.ne.s32.totalorder %s178, %s180
      %p187 = scmp.eq.s32.totalorder %s23, 1
      %p188 = por %p186, %p187
      %p189 = scmp.ne.s32.totalorder %s180, %s181
      %p190 = scmp.eq.s32.totalorder %s23, 0
      %p191 = por %p189, %p190
      %p192 = scmp.ne.s32.totalorder %s180, %s181
      %p193 = scmp.eq.s32.totalorder %s24, 1
      %p194 = por %p192, %p193
      %p196 = scmp.ne.s32.totalorder %s181, %s195
      %p197 = scmp.eq.s32.totalorder %s24, 0
      %p198 = por %p196, %p197
      %s200 = sadd.s32 %s199, 1
      %p203 = scmp.eq.s32.totalorder %s18, 1
      %p204 = scmp.ne.s32.totalorder %s199, %s201
      %p205 = scmp.eq.s32.totalorder %s18, 0
      %p206 = por %p204, %p205
      %p207 = scmp.ne.s32.totalorder %s199, %s201
      %p208 = scmp.eq.s32.totalorder %s23, 1
      %p209 = por %p207, %p208
      %p210 = scmp.ne.s32.totalorder %s201, %s202
      %p211 = scmp.eq.s32.totalorder %s23, 0
      %p212 = por %p210, %p211
      %p213 = scmp.ne.s32.totalorder %s201, %s202
      %p214 = scmp.eq.s32.totalorder %s24, 1
      %p215 = por %p213, %p214
      %p217 = scmp.ne.s32.totalorder %s202, %s216
      %p218 = scmp.eq.s32.totalorder %s24, 0
      %p219 = por %p217, %p218
      %s221 = sadd.s32 %s220, 1
      %p224 = scmp.eq.s32.totalorder %s18, 1
      %p225 = scmp.ne.s32.totalorder %s220, %s222
      %p226 = scmp.eq.s32.totalorder %s18, 0
      %p227 = por %p225, %p226
      %p228 = scmp.ne.s32.totalorder %s220, %s222
      %p229 = scmp.eq.s32.totalorder %s23, 1
      %p230 = por %p228, %p229
      %p231 = scmp.ne.s32.totalorder %s222, %s223
      %p232 = scmp.eq.s32.totalorder %s23, 0
      %p233 = por %p231, %p232
      %p234 = scmp.ne.s32.totalorder %s222, %s223
      %p235 = scmp.eq.s32.totalorder %s24, 1
      %p236 = por %p234, %p235
      %p238 = scmp.ne.s32.totalorder %s223, %s237
      %p239 = scmp.eq.s32.totalorder %s24, 0
      %p240 = por %p238, %p239
      %s241 = ssub.s32 %s18, %s25
      %p242 = scmp.eq.s32.totalorder %s241, 0
      %s244 = sadd.s32 %s243, 1
      %s245 = scalar_select %p242, %s243, %s244
      %p248 = pneg %p242
      %p249 = scmp.eq.s32.totalorder %s18, 1
      %p250 = por %p248, %p249
      %p251 = scmp.ne.s32.totalorder %s243, %s246
      %p252 = scmp.eq.s32.totalorder %s18, 0
      %p253 = por %p251, %p252
      %p254 = scmp.ne.s32.totalorder %s243, %s246
      %p255 = scmp.eq.s32.totalorder %s23, 1
      %p256 = por %p254, %p255
      %p257 = scmp.ne.s32.totalorder %s246, %s247
      %p258 = scmp.eq.s32.totalorder %s23, 0
      %p259 = por %p257, %p258
      %p260 = scmp.ne.s32.totalorder %s246, %s247
      %p261 = scmp.eq.s32.totalorder %s24, 1
      %p262 = por %p260, %p261
      %p264 = scmp.ne.s32.totalorder %s247, %s263
      %p265 = scmp.eq.s32.totalorder %s24, 0
      %p266 = por %p264, %p265
      %p267 = scmp.le.s32.totalorder 1, %s18
      %p268 = scmp.lt.s32.totalorder %s18, 3
      %p269 = pnand %p267, %p268
      %p270 = pneg %p269
      // Predicated region
      $region9: #{tpu_custom_call.1} parent=5 // pred_check
        _
      $region10: #{tpu_custom_call.1} parent=5 // pred_check_branch
        %272 = sbr.rel (%p269) target = $region12
      $region11: #{tpu_custom_call.1} parent=5 // pred_region
        %s273 = ssub.s32 %s18, 1
        // Predicated region
        $region13: #{tpu_custom_call.1} parent=11 // pred_check
          %p274 = pneg %p65
        $region14: #{tpu_custom_call.1} parent=11 // pred_check_branch
          %276 = sbr.rel (%p274) target = $region16
        $region15: #{tpu_custom_call.1} parent=11 // pred_region
          _
        $region16: #{tpu_custom_call.1} parent=11 // pred_fallthru
          _
        // Predicated region
        $region17: #{tpu_custom_call.1} parent=11 // pred_check
          %p277 = pneg %p86
        $region18: #{tpu_custom_call.1} parent=11 // pred_check_branch
          %279 = sbr.rel (%p277) target = $region20
        $region19: #{tpu_custom_call.1} parent=11 // pred_region
          _
        $region20: #{tpu_custom_call.1} parent=11 // pred_fallthru
          _
        // Predicated region
        $region21: #{tpu_custom_call.1} parent=11 // pred_check
          %p280 = pneg %p107
        $region22: #{tpu_custom_call.1} parent=11 // pred_check_branch
          %282 = sbr.rel (%p280) target = $region24
        $region23: #{tpu_custom_call.1} parent=11 // pred_region
          _
        $region24: #{tpu_custom_call.1} parent=11 // pred_fallthru
          _
        // Predicated region
        $region25: #{tpu_custom_call.1} parent=11 // pred_check
          %p283 = pneg %p128
        $region26: #{tpu_custom_call.1} parent=11 // pred_check_branch
          %285 = sbr.rel (%p283) target = $region28
        $region27: #{tpu_custom_call.1} parent=11 // pred_region
          %s287 = ssub.s32 8192, 8192
          %288 = vsyncadd [#allocation3], %s287
          %s289 = sshll.u32 [#allocation2], 4
          %s290 = int_to_ptr.vmem [resolvable:$true] %s289
          %295 = dma.hbm_to_vmem [thread:$0]  %s4, 8192, %s290, [#allocation3], 256, 256, 16
        $region28: #{tpu_custom_call.1} parent=11 // pred_fallthru
          _
        // Predicated region
        $region29: #{tpu_custom_call.1} parent=11 // pred_check
          %p296 = pneg %p149
        $region30: #{tpu_custom_call.1} parent=11 // pred_check_branch
          %298 = sbr.rel (%p296) target = $region32
        $region31: #{tpu_custom_call.1} parent=11 // pred_region
          _
        $region32: #{tpu_custom_call.1} parent=11 // pred_fallthru
          _
        // Predicated region
        $region33: #{tpu_custom_call.1} parent=11 // pred_check
          %p299 = pneg %p170
        $region34: #{tpu_custom_call.1} parent=11 // pred_check_branch
          %301 = sbr.rel (%p299) target = $region36
        $region35: #{tpu_custom_call.1} parent=11 // pred_region
          %s303 = ssub.s32 8192, 8192
          %304 = vsyncadd [#allocation5], %s303
          %s305 = sshll.u32 [#allocation4], 4
          %s306 = int_to_ptr.vmem [resolvable:$true] %s305
          %311 = dma.hbm_to_vmem [thread:$0]  %s6, 8192, %s306, [#allocation5], 256, 256, 16
        $region36: #{tpu_custom_call.1} parent=11 // pred_fallthru
          _
        // Predicated region
        $region37: #{tpu_custom_call.1} parent=11 // pred_check
          %p312 = pneg %p191
        $region38: #{tpu_custom_call.1} parent=11 // pred_check_branch
          %314 = sbr.rel (%p312) target = $region40
        $region39: #{tpu_custom_call.1} parent=11 // pred_region
          _
        $region40: #{tpu_custom_call.1} parent=11 // pred_fallthru
          _
        // Predicated region
        $region41: #{tpu_custom_call.1} parent=11 // pred_check
          %p315 = pneg %p212
        $region42: #{tpu_custom_call.1} parent=11 // pred_check_branch
          %317 = sbr.rel (%p315) target = $region44
        $region43: #{tpu_custom_call.1} parent=11 // pred_region
          _
        $region44: #{tpu_custom_call.1} parent=11 // pred_fallthru
          _
        // Predicated region
        $region45: #{tpu_custom_call.1} parent=11 // pred_check
          %p318 = pneg %p233
        $region46: #{tpu_custom_call.1} parent=11 // pred_check_branch
          %320 = sbr.rel (%p318) target = $region48
        $region47: #{tpu_custom_call.1} parent=11 // pred_region
          _
        $region48: #{tpu_custom_call.1} parent=11 // pred_fallthru
          _
      $region12: #{tpu_custom_call.1} parent=5 // pred_fallthru
        _
      %p321 = scmp.lt.s32.totalorder %s18, 2
      // Predicated region
      $region49: #{tpu_custom_call.1} parent=5 // pred_check
        %p322 = pneg %p321
      $region50: #{tpu_custom_call.1} parent=5 // pred_check_branch
        %324 = sbr.rel (%p322) target = $region52
      $region51: #{tpu_custom_call.1} parent=5 // pred_region
        // Predicated region
        $region53: #{tpu_custom_call.1} parent=51 // pred_check
          %p325 = pneg %p38
        $region54: #{tpu_custom_call.1} parent=51 // pred_check_branch
          %327 = sbr.rel (%p325) target = $region56
        $region55: #{tpu_custom_call.1} parent=51 // pred_region
          %s328 = smul.u32 21, %s18
          %p329 = scmp.lt.s32.totalorder %s328, 41
          %s330 = scalar_select %p329, %s328, 41
          %s331 = smul.addr %s330, 8
          %s332 = scalar_lea.vmem %s0, %s331
          %s333 = smul.u32 21, %s18
        $region56: #{tpu_custom_call.1} parent=51 // pred_fallthru
          _
      $region52: #{tpu_custom_call.1} parent=5 // pred_fallthru
        _
      %p334 = scmp.le.s32.totalorder 1, %s18
      %p335 = scmp.lt.s32.totalorder %s18, 3
      %p336 = pnand %p334, %p335
      %p337 = pneg %p336
      // Predicated region
      $region57: #{tpu_custom_call.1} parent=5 // pred_check
        _
      $region58: #{tpu_custom_call.1} parent=5 // pred_check_branch
        %339 = sbr.rel (%p336) target = $region60
      $region59: #{tpu_custom_call.1} parent=5 // pred_region
        %s340 = ssub.s32 %s18, 1
        // Predicated region
        $region61: #{tpu_custom_call.1} parent=59 // pred_check
          %p341 = pneg %p128
        $region62: #{tpu_custom_call.1} parent=59 // pred_check_branch
          %343 = sbr.rel (%p341) target = $region64
        $region63: #{tpu_custom_call.1} parent=59 // pred_region
          %344 = dma.done [#allocation3], 8192
        $region64: #{tpu_custom_call.1} parent=59 // pred_fallthru
          _
        // Predicated region
        $region65: #{tpu_custom_call.1} parent=59 // pred_check
          %p345 = pneg %p170
        $region66: #{tpu_custom_call.1} parent=59 // pred_check_branch
          %347 = sbr.rel (%p345) target = $region68
        $region67: #{tpu_custom_call.1} parent=59 // pred_region
          %348 = dma.done [#allocation5], 8192
        $region68: #{tpu_custom_call.1} parent=59 // pred_fallthru
          _
        %s349 = smul.u32 21, %s23
        %p350 = scmp.lt.s32.totalorder %s349, 41
        %s351 = scalar_select %p350, %s349, 41
        %s352 = smul.addr %s351, 8
        %s353 = scalar_lea.vmem %s0, %s352
        %p354 = pneg %p44
        %p355 = pneg %p41
        %p356 = pneg %p65
        %p357 = pneg %p62
        %p358 = pneg %p86
        %p359 = pneg %p83
        %p360 = pneg %p107
        %p361 = pneg %p104
        %p362 = pneg %p128
        %p363 = pneg %p125
        %p364 = pneg %p149
        %p365 = pneg %p146
        %p366 = pneg %p170
        %p367 = pneg %p167
        %p368 = pneg %p191
        %p369 = pneg %p188
        %p370 = pneg %p212
        %p371 = pneg %p209
        %p372 = pneg %p233
        %p373 = pneg %p230
        %p374 = pneg %p259
        %p375 = pneg %p256
        %s376 = smul.u32 21, %s23
        %p377 = scmp.lt.s32.totalorder %s376, 41
        %s378 = scalar_select %p377, %s376, 41
        %s379 = smul.addr %s378, 8
        %s380 = scalar_lea.vmem %s10, %s379
        %s381 = smul.u32 21, %s23
        %p382 = scmp.lt.s32.totalorder %s381, 41
        %s383 = scalar_select %p382, %s381, 41
        %s384 = smul.addr %s383, 8
        %s385 = scalar_lea.vmem %s0, %s384
        %s386 = smul.u32 21, %s23
        %s387 = smul.u32 21, %s23
        %p388 = scmp.lt.s32.totalorder %s387, 41
        %s389 = scalar_select %p388, %s387, 41
        %s390 = smul.addr %s389, 8
        %s391 = scalar_lea.vmem %s10, %s390
        %s392 = smul.u32 21, %s23
        %v393 = vld [vmem:[%s385] sm:$0xff]
        %v394 = vld [vmem:[%s385 + $0x8] sm:$0xff]
        %v395 = vld [vmem:[%s385 + $0x10] sm:$0xff]
        %v396 = vld [vmem:[%s385 + $0x18] sm:$0xff]
        %v397 = vld [vmem:[%s385 + $0x20] sm:$0xff]
        %v398 = vld [vmem:[%s385 + $0x28] sm:$0xff]
        %v399 = vld [vmem:[%s385 + $0x30] sm:$0xff]
        %v400 = vld [vmem:[%s385 + $0x38] sm:$0xff]
        %v401 = vld [vmem:[%s385 + $0x40] sm:$0xff]
        %v402 = vld [vmem:[%s385 + $0x48] sm:$0xff]
        %v403 = vld [vmem:[%s385 + $0x50] sm:$0xff]
        %v404 = vld [vmem:[%s385 + $0x58] sm:$0xff]
        %v405 = vld [vmem:[%s385 + $0x60] sm:$0xff]
        %v406 = vld [vmem:[%s385 + $0x68] sm:$0xff]
        %v407 = vld [vmem:[%s385 + $0x70] sm:$0xff]
        %v408 = vld [vmem:[%s385 + $0x78] sm:$0xff]
        %v409 = vld [vmem:[%s385 + $0x80] sm:$0xff]
        %v410 = vld [vmem:[%s385 + $0x88] sm:$0xff]
        %v411 = vld [vmem:[%s385 + $0x90] sm:$0xff]
        %v412 = vld [vmem:[%s385 + $0x98] sm:$0xff]
        %v413 = vld [vmem:[%s385 + $0xa0] sm:$0xff]
        %v414 = vld [vmem:[%s1] sm:$0xff]
        %v415 = vld [vmem:[%s1 + $0x8] sm:$0xff]
        %vm416 = vcmask 64512
        %v418 = vsel %vm416, %v393, 0
        %v421 = vsel %vm416, %v394, 0
        %v424 = vsel %vm416, %v395, 0
        %v427 = vsel %vm416, %v396, 0
        %v430 = vsel %vm416, %v397, 0
        %v433 = vsel %vm416, %v398, 0
        %v436 = vsel %vm416, %v399, 0
        %v439 = vsel %vm416, %v400, 0
        %v442 = vsel %vm416, %v401, 0
        %v445 = vsel %vm416, %v402, 0
        %v448 = vsel %vm416, %v403, 0
        %v451 = vsel %vm416, %v404, 0
        %v454 = vsel %vm416, %v405, 0
        %v457 = vsel %vm416, %v406, 0
        %v460 = vsel %vm416, %v407, 0
        %v463 = vsel %vm416, %v408, 0
        %v466 = vsel %vm416, %v409, 0
        %v469 = vsel %vm416, %v410, 0
        %v472 = vsel %vm416, %v411, 0
        %v475 = vsel %vm416, %v412, 0
        %v478 = vsel %vm416, %v413, 0
        %480 = vmatprep.subr.mxu0 0.0
        %481 = vmatpush1.msra.mxu0 0.0
        %482 = vmatprep.subr.mxu0 0.0
        %483 = vmatpush1.msra.mxu0 0.0
        %484 = vmatprep.subr.mxu0 0.0
        %485 = vmatpush1.msra.mxu0 0.0
        %486 = vmatprep.subr.mxu0 0.0
        %487 = vmatpush1.msra.mxu0 0.0
        %488 = vmatprep.subr.mxu0 0.0
        %489 = vmatpush1.msra.mxu0 0.0
        %490 = vmatprep.subr.mxu0 0.0
        %491 = vmatpush1.msra.mxu0 0.0
        %492 = vmatprep.subr.mxu0 0.0
        %493 = vmatpush1.msra.mxu0 0.0
        %494 = vmatprep.subr.mxu0 0.0
        %495 = vmatpush1.msra.mxu0 0.0
        %496 = vmatprep.subr.mxu0 0.0
        %497 = vmatpush1.msra.mxu0 0.0
        %498 = vmatprep.subr.mxu0 0.0
        %499 = vmatpush1.msra.mxu0 0.0
        %500 = vmatprep.subr.mxu0 0.0
        %501 = vmatpush1.msra.mxu0 0.0
        %502 = vmatprep.subr.mxu0 0.0
        %503 = vmatpush1.msra.mxu0 0.0
        %504 = vmatprep.subr.mxu0 0.0
        %505 = vmatpush1.msra.mxu0 0.0
        %506 = vmatprep.subr.mxu0 0.0
        %507 = vmatpush1.msra.mxu0 0.0
        %508 = vmatprep.subr.mxu0 0.0
        %509 = vmatpush1.msra.mxu0 0.0
        %510 = vmatprep.subr.mxu0 %v415
        %511 = vmatpush1.msra.mxu0 %v414
        %512 = vmatprep.subr.mxu0 0.0
        %513 = vmatpush2.msra.mxu0 0.0
        %514 = vmatprep.subr.mxu0 0.0
        %515 = vmatpush2.msra.mxu0 0.0
        %516 = vmatprep.subr.mxu0 0.0
        %517 = vmatpush2.msra.mxu0 0.0
        %518 = vmatprep.subr.mxu0 0.0
        %519 = vmatpush2.msra.mxu0 0.0
        %520 = vmatprep.subr.mxu0 0.0
        %521 = vmatpush2.msra.mxu0 0.0
        %522 = vmatprep.subr.mxu0 0.0
        %523 = vmatpush2.msra.mxu0 0.0
        %524 = vmatprep.subr.mxu0 0.0
        %525 = vmatpush2.msra.mxu0 0.0
        %526 = vmatprep.subr.mxu0 0.0
        %527 = vmatpush2.msra.mxu0 0.0
        %528 = vmatprep.subr.mxu0 0.0
        %529 = vmatpush2.msra.mxu0 0.0
        %530 = vmatprep.subr.mxu0 0.0
        %531 = vmatpush2.msra.mxu0 0.0
        %532 = vmatprep.subr.mxu0 0.0
        %533 = vmatpush2.msra.mxu0 0.0
        %534 = vmatprep.subr.mxu0 0.0
        %535 = vmatpush2.msra.mxu0 0.0
        %536 = vmatprep.subr.mxu0 0.0
        %537 = vmatpush2.msra.mxu0 0.0
        %538 = vmatprep.subr.mxu0 0.0
        %539 = vmatpush2.msra.mxu0 0.0
        %540 = vmatprep.subr.mxu0 0.0
        %541 = vmatpush2.msra.mxu0 0.0
        %542 = vmatprep.subr.mxu0 0.0
        %543 = vmatpush2.msra.mxu0 0.0
        %544 = vmatprep.mubr.f32.mxu0 0.0
        %545 = vmatmul.mubr.f32.gmra.mxu0 %v418
        %v546 = vpop.f32.mrf.mxu0
        %v547 = vadd.f32 0.0, %v546
        %v548 = vpop.f32.mrf.mxu0
        %v549 = vadd.f32 0.0, %v548
        %550 = vmatprep.mubr.f32.mxu0 0.0
        %551 = vmatmul.mubr.f32.gmra.mxu0 %v421
        %v552 = vpop.f32.mrf.mxu0
        %v553 = vadd.f32 0.0, %v552
        %v554 = vpop.f32.mrf.mxu0
        %v555 = vadd.f32 0.0, %v554
        %556 = vmatprep.mubr.f32.mxu0 0.0
        %557 = vmatmul.mubr.f32.gmra.mxu0 %v424
        %v558 = vpop.f32.mrf.mxu0
        %v559 = vadd.f32 0.0, %v558
        %v560 = vpop.f32.mrf.mxu0
        %v561 = vadd.f32 0.0, %v560
        %562 = vmatprep.mubr.f32.mxu0 0.0
        %563 = vmatmul.mubr.f32.gmra.mxu0 %v427
        %v564 = vpop.f32.mrf.mxu0
        %v565 = vadd.f32 0.0, %v564
        %v566 = vpop.f32.mrf.mxu0
        %v567 = vadd.f32 0.0, %v566
        %568 = vmatprep.mubr.f32.mxu0 0.0
        %569 = vmatmul.mubr.f32.gmra.mxu0 %v430
        %v570 = vpop.f32.mrf.mxu0
        %v571 = vadd.f32 0.0, %v570
        %v572 = vpop.f32.mrf.mxu0
        %v573 = vadd.f32 0.0, %v572
        %574 = vmatprep.mubr.f32.mxu0 0.0
        %575 = vmatmul.mubr.f32.gmra.mxu0 %v433
        %v576 = vpop.f32.mrf.mxu0
        %v577 = vadd.f32 0.0, %v576
        %v578 = vpop.f32.mrf.mxu0
        %v579 = vadd.f32 0.0, %v578
        %580 = vmatprep.mubr.f32.mxu0 0.0
        %581 = vmatmul.mubr.f32.gmra.mxu0 %v436
        %v582 = vpop.f32.mrf.mxu0
        %v583 = vadd.f32 0.0, %v582
        %v584 = vpop.f32.mrf.mxu0
        %v585 = vadd.f32 0.0, %v584
        %586 = vmatprep.mubr.f32.mxu0 0.0
        %587 = vmatmul.mubr.f32.gmra.mxu0 %v439
        %v588 = vpop.f32.mrf.mxu0
        %v589 = vadd.f32 0.0, %v588
        %v590 = vpop.f32.mrf.mxu0
        %v591 = vadd.f32 0.0, %v590
        %592 = vmatprep.mubr.f32.mxu0 0.0
        %593 = vmatmul.mubr.f32.gmra.mxu0 %v442
        %v594 = vpop.f32.mrf.mxu0
        %v595 = vadd.f32 0.0, %v594
        %v596 = vpop.f32.mrf.mxu0
        %v597 = vadd.f32 0.0, %v596
        %598 = vmatprep.mubr.f32.mxu0 0.0
        %599 = vmatmul.mubr.f32.gmra.mxu0 %v445
        %v600 = vpop.f32.mrf.mxu0
        %v601 = vadd.f32 0.0, %v600
        %v602 = vpop.f32.mrf.mxu0
        %v603 = vadd.f32 0.0, %v602
        %604 = vmatprep.mubr.f32.mxu0 0.0
        %605 = vmatmul.mubr.f32.gmra.mxu0 %v448
        %v606 = vpop.f32.mrf.mxu0
        %v607 = vadd.f32 0.0, %v606
        %v608 = vpop.f32.mrf.mxu0
        %v609 = vadd.f32 0.0, %v608
        %610 = vmatprep.mubr.f32.mxu0 0.0
        %611 = vmatmul.mubr.f32.gmra.mxu0 %v451
        %v612 = vpop.f32.mrf.mxu0
        %v613 = vadd.f32 0.0, %v612
        %v614 = vpop.f32.mrf.mxu0
        %v615 = vadd.f32 0.0, %v614
        %616 = vmatprep.mubr.f32.mxu0 0.0
        %617 = vmatmul.mubr.f32.gmra.mxu0 %v454
        %v618 = vpop.f32.mrf.mxu0
        %v619 = vadd.f32 0.0, %v618
        %v620 = vpop.f32.mrf.mxu0
        %v621 = vadd.f32 0.0, %v620
        %622 = vmatprep.mubr.f32.mxu0 0.0
        %623 = vmatmul.mubr.f32.gmra.mxu0 %v457
        %v624 = vpop.f32.mrf.mxu0
        %v625 = vadd.f32 0.0, %v624
        %v626 = vpop.f32.mrf.mxu0
        %v627 = vadd.f32 0.0, %v626
        %628 = vmatprep.mubr.f32.mxu0 0.0
        %629 = vmatmul.mubr.f32.gmra.mxu0 %v460
        %v630 = vpop.f32.mrf.mxu0
        %v631 = vadd.f32 0.0, %v630
        %v632 = vpop.f32.mrf.mxu0
        %v633 = vadd.f32 0.0, %v632
        %634 = vmatprep.mubr.f32.mxu0 0.0
        %635 = vmatmul.mubr.f32.gmra.mxu0 %v463
        %v636 = vpop.f32.mrf.mxu0
        %v637 = vadd.f32 0.0, %v636
        %v638 = vpop.f32.mrf.mxu0
        %v639 = vadd.f32 0.0, %v638
        %640 = vmatprep.mubr.f32.mxu0 0.0
        %641 = vmatmul.mubr.f32.gmra.mxu0 %v466
        %v642 = vpop.f32.mrf.mxu0
        %v643 = vadd.f32 0.0, %v642
        %v644 = vpop.f32.mrf.mxu0
        %v645 = vadd.f32 0.0, %v644
        %646 = vmatprep.mubr.f32.mxu0 0.0
        %647 = vmatmul.mubr.f32.gmra.mxu0 %v469
        %v648 = vpop.f32.mrf.mxu0
        %v649 = vadd.f32 0.0, %v648
        %v650 = vpop.f32.mrf.mxu0
        %v651 = vadd.f32 0.0, %v650
        %652 = vmatprep.mubr.f32.mxu0 0.0
        %653 = vmatmul.mubr.f32.gmra.mxu0 %v472
        %v654 = vpop.f32.mrf.mxu0
        %v655 = vadd.f32 0.0, %v654
        %v656 = vpop.f32.mrf.mxu0
        %v657 = vadd.f32 0.0, %v656
        %658 = vmatprep.mubr.f32.mxu0 0.0
        %659 = vmatmul.mubr.f32.gmra.mxu0 %v475
        %v660 = vpop.f32.mrf.mxu0
        %v661 = vadd.f32 0.0, %v660
        %v662 = vpop.f32.mrf.mxu0
        %v663 = vadd.f32 0.0, %v662
        %664 = vmatprep.mubr.f32.mxu0 0.0
        %665 = vmatmul.mubr.f32.gmra.mxu0 %v478
        %v666 = vpop.f32.mrf.mxu0
        %v667 = vadd.f32 0.0, %v666
        %v668 = vpop.f32.mrf.mxu0
        %v669 = vadd.f32 0.0, %v668
        %670 = vdwg.mxu0
        %v671 = vtanh.pop %v547
        %v672 = vtanh.pop %v549
        %v673 = vtanh.pop %v553
        %v674 = vtanh.pop %v555
        %v675 = vtanh.pop %v559
        %v676 = vtanh.pop %v561
        %v677 = vtanh.pop %v565
        %v678 = vtanh.pop %v567
        %v679 = vtanh.pop %v571
        %v680 = vtanh.pop %v573
        %v681 = vtanh.pop %v577
        %v682 = vtanh.pop %v579
        %v683 = vtanh.pop %v583
        %v684 = vtanh.pop %v585
        %v685 = vtanh.pop %v589
        %v686 = vtanh.pop %v591
        %v687 = vtanh.pop %v595
        %v688 = vtanh.pop %v597
        %v689 = vtanh.pop %v601
        %v690 = vtanh.pop %v603
        %v691 = vtanh.pop %v607
        %v692 = vtanh.pop %v609
        %v693 = vtanh.pop %v613
        %v694 = vtanh.pop %v615
        %v695 = vtanh.pop %v619
        %v696 = vtanh.pop %v621
        %v697 = vtanh.pop %v625
        %v698 = vtanh.pop %v627
        %v699 = vtanh.pop %v631
        %v700 = vtanh.pop %v633
        %v701 = vtanh.pop %v637
        %v702 = vtanh.pop %v639
        %v703 = vtanh.pop %v643
        %v704 = vtanh.pop %v645
        %v705 = vtanh.pop %v649
        %v706 = vtanh.pop %v651
        %v707 = vtanh.pop %v655
        %v708 = vtanh.pop %v657
        %v709 = vtanh.pop %v661
        %v710 = vtanh.pop %v663
        %v711 = vtanh.pop %v667
        %v712 = vtanh.pop %v669
        %v713 = vld [vmem:[%s2] sm:$0xff]
        %v714 = vld [vmem:[%s2 + $0x8] sm:$0xff]
        %v715 = vld [vmem:[%s2 + $0x10] sm:$0xff]
        %v716 = vld [vmem:[%s2 + $0x18] sm:$0xff]
        %v717 = vld [vmem:[%s2 + $0x20] sm:$0xff]
        %v718 = vld [vmem:[%s2 + $0x28] sm:$0xff]
        %v719 = vld [vmem:[%s2 + $0x30] sm:$0xff]
        %v720 = vld [vmem:[%s2 + $0x38] sm:$0xff]
        %v721 = vld [vmem:[%s2 + $0x40] sm:$0xff]
        %v722 = vld [vmem:[%s2 + $0x48] sm:$0xff]
        %v723 = vld [vmem:[%s2 + $0x50] sm:$0xff]
        %v724 = vld [vmem:[%s2 + $0x58] sm:$0xff]
        %v725 = vld [vmem:[%s2 + $0x60] sm:$0xff]
        %v726 = vld [vmem:[%s2 + $0x68] sm:$0xff]
        %v727 = vld [vmem:[%s2 + $0x70] sm:$0xff]
        %v728 = vld [vmem:[%s2 + $0x78] sm:$0xff]
        %v729 = vld [vmem:[%s2 + $0x80] sm:$0xff]
        %v730 = vld [vmem:[%s2 + $0x88] sm:$0xff]
        %v731 = vld [vmem:[%s2 + $0x90] sm:$0xff]
        %v732 = vld [vmem:[%s2 + $0x98] sm:$0xff]
        %v733 = vld [vmem:[%s2 + $0xa0] sm:$0xff]
        %v734 = vld [vmem:[%s2 + $0xa8] sm:$0xff]
        %v735 = vld [vmem:[%s2 + $0xb0] sm:$0xff]
        %v736 = vld [vmem:[%s2 + $0xb8] sm:$0xff]
        %v737 = vld [vmem:[%s2 + $0xc0] sm:$0xff]
        %v738 = vld [vmem:[%s2 + $0xc8] sm:$0xff]
        %v739 = vld [vmem:[%s2 + $0xd0] sm:$0xff]
        %v740 = vld [vmem:[%s2 + $0xd8] sm:$0xff]
        %v741 = vld [vmem:[%s2 + $0xe0] sm:$0xff]
        %v742 = vld [vmem:[%s2 + $0xe8] sm:$0xff]
        %v743 = vld [vmem:[%s2 + $0xf0] sm:$0xff]
        %v744 = vld [vmem:[%s2 + $0xf8] sm:$0xff]
        %v745 = vld [vmem:[%s2 + $0x100] sm:$0xff]
        %v746 = vld [vmem:[%s2 + $0x108] sm:$0xff]
        %v747 = vld [vmem:[%s2 + $0x110] sm:$0xff]
        %v748 = vld [vmem:[%s2 + $0x118] sm:$0xff]
        %v749 = vld [vmem:[%s2 + $0x120] sm:$0xff]
        %v750 = vld [vmem:[%s2 + $0x128] sm:$0xff]
        %v751 = vld [vmem:[%s2 + $0x130] sm:$0xff]
        %v752 = vld [vmem:[%s2 + $0x138] sm:$0xff]
        %v753 = vld [vmem:[%s2 + $0x140] sm:$0xff]
        %v754 = vld [vmem:[%s2 + $0x148] sm:$0xff]
        %v755 = vld [vmem:[%s2 + $0x150] sm:$0xff]
        %v756 = vld [vmem:[%s2 + $0x158] sm:$0xff]
        %v757 = vld [vmem:[%s2 + $0x160] sm:$0xff]
        %v758 = vld [vmem:[%s2 + $0x168] sm:$0xff]
        %v759 = vld [vmem:[%s2 + $0x170] sm:$0xff]
        %v760 = vld [vmem:[%s2 + $0x178] sm:$0xff]
        %v761 = vld [vmem:[%s2 + $0x180] sm:$0xff]
        %v762 = vld [vmem:[%s2 + $0x188] sm:$0xff]
        %v763 = vld [vmem:[%s2 + $0x190] sm:$0xff]
        %v764 = vld [vmem:[%s2 + $0x198] sm:$0xff]
        %v765 = vld [vmem:[%s2 + $0x1a0] sm:$0xff]
        %v766 = vld [vmem:[%s2 + $0x1a8] sm:$0xff]
        %v767 = vld [vmem:[%s2 + $0x1b0] sm:$0xff]
        %v768 = vld [vmem:[%s2 + $0x1b8] sm:$0xff]
        %v769 = vld [vmem:[%s2 + $0x1c0] sm:$0xff]
        %v770 = vld [vmem:[%s2 + $0x1c8] sm:$0xff]
        %v771 = vld [vmem:[%s2 + $0x1d0] sm:$0xff]
        %v772 = vld [vmem:[%s2 + $0x1d8] sm:$0xff]
        %v773 = vld [vmem:[%s2 + $0x1e0] sm:$0xff]
        %v774 = vld [vmem:[%s2 + $0x1e8] sm:$0xff]
        %v775 = vld [vmem:[%s2 + $0x1f0] sm:$0xff]
        %v776 = vld [vmem:[%s2 + $0x1f8] sm:$0xff]
        %v777 = vld [vmem:[%s3] sm:$0x3]
        %v779 = vlaneseq
        %v780 = vshrl.u32 %v779, 7
        %v781 = vsub.s32 0, %v780
        %v782 = vrot.slane %v777, %v781
        %v783 = vlaneseq
        %v784 = vshrl.u32 %v783, 7
        %v785 = vsub.s32 1, %v784
        %v786 = vrot.slane %v777, %v785
        %789 = vmatprep.subr.mxu0 %v744
        %790 = vmatpush1.msra.mxu0 %v743
        %791 = vmatprep.subr.mxu0 %v742
        %792 = vmatpush1.msra.mxu0 %v741
        %793 = vmatprep.subr.mxu0 %v740
        %794 = vmatpush1.msra.mxu0 %v739
        %795 = vmatprep.subr.mxu0 %v738
        %796 = vmatpush1.msra.mxu0 %v737
        %797 = vmatprep.subr.mxu0 %v736
        %798 = vmatpush1.msra.mxu0 %v735
        %799 = vmatprep.subr.mxu0 %v734
        %800 = vmatpush1.msra.mxu0 %v733
        %801 = vmatprep.subr.mxu0 %v732
        %802 = vmatpush1.msra.mxu0 %v731
        %803 = vmatprep.subr.mxu0 %v730
        %804 = vmatpush1.msra.mxu0 %v729
        %805 = vmatprep.subr.mxu0 %v728
        %806 = vmatpush1.msra.mxu0 %v727
        %807 = vmatprep.subr.mxu0 %v726
        %808 = vmatpush1.msra.mxu0 %v725
        %809 = vmatprep.subr.mxu0 %v724
        %810 = vmatpush1.msra.mxu0 %v723
        %811 = vmatprep.subr.mxu0 %v722
        %812 = vmatpush1.msra.mxu0 %v721
        %813 = vmatprep.subr.mxu0 %v720
        %814 = vmatpush1.msra.mxu0 %v719
        %815 = vmatprep.subr.mxu0 %v718
        %816 = vmatpush1.msra.mxu0 %v717
        %817 = vmatprep.subr.mxu0 %v716
        %818 = vmatpush1.msra.mxu0 %v715
        %819 = vmatprep.subr.mxu0 %v714
        %820 = vmatpush1.msra.mxu0 %v713
        %821 = vmatprep.subr.mxu0 %v776
        %822 = vmatpush2.msra.mxu0 %v775
        %823 = vmatprep.subr.mxu0 %v774
        %824 = vmatpush2.msra.mxu0 %v773
        %825 = vmatprep.subr.mxu0 %v772
        %826 = vmatpush2.msra.mxu0 %v771
        %827 = vmatprep.subr.mxu0 %v770
        %828 = vmatpush2.msra.mxu0 %v769
        %829 = vmatprep.subr.mxu0 %v768
        %830 = vmatpush2.msra.mxu0 %v767
        %831 = vmatprep.subr.mxu0 %v766
        %832 = vmatpush2.msra.mxu0 %v765
        %833 = vmatprep.subr.mxu0 %v764
        %834 = vmatpush2.msra.mxu0 %v763
        %835 = vmatprep.subr.mxu0 %v762
        %836 = vmatpush2.msra.mxu0 %v761
        %837 = vmatprep.subr.mxu0 %v760
        %838 = vmatpush2.msra.mxu0 %v759
        %839 = vmatprep.subr.mxu0 %v758
        %840 = vmatpush2.msra.mxu0 %v757
        %841 = vmatprep.subr.mxu0 %v756
        %842 = vmatpush2.msra.mxu0 %v755
        %843 = vmatprep.subr.mxu0 %v754
        %844 = vmatpush2.msra.mxu0 %v753
        %845 = vmatprep.subr.mxu0 %v752
        %846 = vmatpush2.msra.mxu0 %v751
        %847 = vmatprep.subr.mxu0 %v750
        %848 = vmatpush2.msra.mxu0 %v749
        %849 = vmatprep.subr.mxu0 %v748
        %850 = vmatpush2.msra.mxu0 %v747
        %851 = vmatprep.subr.mxu0 %v746
        %852 = vmatpush2.msra.mxu0 %v745
        %853 = vmatprep.mubr.f32.mxu0 %v672
        %854 = vmatmul.mubr.f32.gmra.mxu0 %v671
        %v855 = vpop.f32.mrf.mxu0
        %v856 = vadd.f32 %v782, %v855
        %v857 = vpop.f32.mrf.mxu0
        %v858 = vadd.f32 %v786, %v857
        %859 = vmatprep.mubr.f32.mxu0 %v674
        %860 = vmatmul.mubr.f32.gmra.mxu0 %v673
        %v861 = vpop.f32.mrf.mxu0
        %v862 = vadd.f32 %v782, %v861
        %v863 = vpop.f32.mrf.mxu0
        %v864 = vadd.f32 %v786, %v863
        %865 = vmatprep.mubr.f32.mxu0 %v676
        %866 = vmatmul.mubr.f32.gmra.mxu0 %v675
        %v867 = vpop.f32.mrf.mxu0
        %v868 = vadd.f32 %v782, %v867
        %v869 = vpop.f32.mrf.mxu0
        %v870 = vadd.f32 %v786, %v869
        %871 = vmatprep.mubr.f32.mxu0 %v678
        %872 = vmatmul.mubr.f32.gmra.mxu0 %v677
        %v873 = vpop.f32.mrf.mxu0
        %v874 = vadd.f32 %v782, %v873
        %v875 = vpop.f32.mrf.mxu0
        %v876 = vadd.f32 %v786, %v875
        %877 = vmatprep.mubr.f32.mxu0 %v680
        %878 = vmatmul.mubr.f32.gmra.mxu0 %v679
        %v879 = vpop.f32.mrf.mxu0
        %v880 = vadd.f32 %v782, %v879
        %v881 = vpop.f32.mrf.mxu0
        %v882 = vadd.f32 %v786, %v881
        %883 = vmatprep.mubr.f32.mxu0 %v682
        %884 = vmatmul.mubr.f32.gmra.mxu0 %v681
        %v885 = vpop.f32.mrf.mxu0
        %v886 = vadd.f32 %v782, %v885
        %v887 = vpop.f32.mrf.mxu0
        %v888 = vadd.f32 %v786, %v887
        %889 = vmatprep.mubr.f32.mxu0 %v684
        %890 = vmatmul.mubr.f32.gmra.mxu0 %v683
        %v891 = vpop.f32.mrf.mxu0
        %v892 = vadd.f32 %v782, %v891
        %v893 = vpop.f32.mrf.mxu0
        %v894 = vadd.f32 %v786, %v893
        %895 = vmatprep.mubr.f32.mxu0 %v686
        %896 = vmatmul.mubr.f32.gmra.mxu0 %v685
        %v897 = vpop.f32.mrf.mxu0
        %v898 = vadd.f32 %v782, %v897
        %v899 = vpop.f32.mrf.mxu0
        %v900 = vadd.f32 %v786, %v899
        %901 = vmatprep.mubr.f32.mxu0 %v688
        %902 = vmatmul.mubr.f32.gmra.mxu0 %v687
        %v903 = vpop.f32.mrf.mxu0
        %v904 = vadd.f32 %v782, %v903
        %v905 = vpop.f32.mrf.mxu0
        %v906 = vadd.f32 %v786, %v905
        %907 = vmatprep.mubr.f32.mxu0 %v690
        %908 = vmatmul.mubr.f32.gmra.mxu0 %v689
        %v909 = vpop.f32.mrf.mxu0
        %v910 = vadd.f32 %v782, %v909
        %v911 = vpop.f32.mrf.mxu0
        %v912 = vadd.f32 %v786, %v911
        %913 = vmatprep.mubr.f32.mxu0 %v692
        %914 = vmatmul.mubr.f32.gmra.mxu0 %v691
        %v915 = vpop.f32.mrf.mxu0
        %v916 = vadd.f32 %v782, %v915
        %v917 = vpop.f32.mrf.mxu0
        %v918 = vadd.f32 %v786, %v917
        %919 = vmatprep.mubr.f32.mxu0 %v694
        %920 = vmatmul.mubr.f32.gmra.mxu0 %v693
        %v921 = vpop.f32.mrf.mxu0
        %v922 = vadd.f32 %v782, %v921
        %v923 = vpop.f32.mrf.mxu0
        %v924 = vadd.f32 %v786, %v923
        %925 = vmatprep.mubr.f32.mxu0 %v696
        %926 = vmatmul.mubr.f32.gmra.mxu0 %v695
        %v927 = vpop.f32.mrf.mxu0
        %v928 = vadd.f32 %v782, %v927
        %v929 = vpop.f32.mrf.mxu0
        %v930 = vadd.f32 %v786, %v929
        %931 = vmatprep.mubr.f32.mxu0 %v698
        %932 = vmatmul.mubr.f32.gmra.mxu0 %v697
        %v933 = vpop.f32.mrf.mxu0
        %v934 = vadd.f32 %v782, %v933
        %v935 = vpop.f32.mrf.mxu0
        %v936 = vadd.f32 %v786, %v935
        %937 = vmatprep.mubr.f32.mxu0 %v700
        %938 = vmatmul.mubr.f32.gmra.mxu0 %v699
        %v939 = vpop.f32.mrf.mxu0
        %v940 = vadd.f32 %v782, %v939
        %v941 = vpop.f32.mrf.mxu0
        %v942 = vadd.f32 %v786, %v941
        %943 = vmatprep.mubr.f32.mxu0 %v702
        %944 = vmatmul.mubr.f32.gmra.mxu0 %v701
        %v945 = vpop.f32.mrf.mxu0
        %v946 = vadd.f32 %v782, %v945
        %v947 = vpop.f32.mrf.mxu0
        %v948 = vadd.f32 %v786, %v947
        %949 = vmatprep.mubr.f32.mxu0 %v704
        %950 = vmatmul.mubr.f32.gmra.mxu0 %v703
        %v951 = vpop.f32.mrf.mxu0
        %v952 = vadd.f32 %v782, %v951
        %v953 = vpop.f32.mrf.mxu0
        %v954 = vadd.f32 %v786, %v953
        %955 = vmatprep.mubr.f32.mxu0 %v706
        %956 = vmatmul.mubr.f32.gmra.mxu0 %v705
        %v957 = vpop.f32.mrf.mxu0
        %v958 = vadd.f32 %v782, %v957
        %v959 = vpop.f32.mrf.mxu0
        %v960 = vadd.f32 %v786, %v959
        %961 = vmatprep.mubr.f32.mxu0 %v708
        %962 = vmatmul.mubr.f32.gmra.mxu0 %v707
        %v963 = vpop.f32.mrf.mxu0
        %v964 = vadd.f32 %v782, %v963
        %v965 = vpop.f32.mrf.mxu0
        %v966 = vadd.f32 %v786, %v965
        %967 = vmatprep.mubr.f32.mxu0 %v710
        %968 = vmatmul.mubr.f32.gmra.mxu0 %v709
        %v969 = vpop.f32.mrf.mxu0
        %v970 = vadd.f32 %v782, %v969
        %v971 = vpop.f32.mrf.mxu0
        %v972 = vadd.f32 %v786, %v971
        %973 = vmatprep.mubr.f32.mxu0 %v712
        %974 = vmatmul.mubr.f32.gmra.mxu0 %v711
        %v975 = vpop.f32.mrf.mxu0
        %v976 = vadd.f32 %v782, %v975
        %v977 = vpop.f32.mrf.mxu0
        %v978 = vadd.f32 %v786, %v977
        %979 = vdwg.mxu0
        %v980 = vtanh.pop %v856
        %v981 = vtanh.pop %v858
        %v982 = vtanh.pop %v862
        %v983 = vtanh.pop %v864
        %v984 = vtanh.pop %v868
        %v985 = vtanh.pop %v870
        %v986 = vtanh.pop %v874
        %v987 = vtanh.pop %v876
        %v988 = vtanh.pop %v880
        %v989 = vtanh.pop %v882
        %v990 = vtanh.pop %v886
        %v991 = vtanh.pop %v888
        %v992 = vtanh.pop %v892
        %v993 = vtanh.pop %v894
        %v994 = vtanh.pop %v898
        %v995 = vtanh.pop %v900
        %v996 = vtanh.pop %v904
        %v997 = vtanh.pop %v906
        %v998 = vtanh.pop %v910
        %v999 = vtanh.pop %v912
        %v1000 = vtanh.pop %v916
        %v1001 = vtanh.pop %v918
        %v1002 = vtanh.pop %v922
        %v1003 = vtanh.pop %v924
        %v1004 = vtanh.pop %v928
        %v1005 = vtanh.pop %v930
        %v1006 = vtanh.pop %v934
        %v1007 = vtanh.pop %v936
        %v1008 = vtanh.pop %v940
        %v1009 = vtanh.pop %v942
        %v1010 = vtanh.pop %v946
        %v1011 = vtanh.pop %v948
        %v1012 = vtanh.pop %v952
        %v1013 = vtanh.pop %v954
        %v1014 = vtanh.pop %v958
        %v1015 = vtanh.pop %v960
        %v1016 = vtanh.pop %v964
        %v1017 = vtanh.pop %v966
        %v1018 = vtanh.pop %v970
        %v1019 = vtanh.pop %v972
        %v1020 = vtanh.pop %v976
        %v1021 = vtanh.pop %v978
        %v1022 = vld [vmem:[#allocation2] sm:$0xff]
        %v1023 = vld [vmem:[#allocation2 + $0x8] sm:$0xff]
        %v1024 = vld [vmem:[#allocation2 + $0x10] sm:$0xff]
        %v1025 = vld [vmem:[#allocation2 + $0x18] sm:$0xff]
        %v1026 = vld [vmem:[#allocation2 + $0x20] sm:$0xff]
        %v1027 = vld [vmem:[#allocation2 + $0x28] sm:$0xff]
        %v1028 = vld [vmem:[#allocation2 + $0x30] sm:$0xff]
        %v1029 = vld [vmem:[#allocation2 + $0x38] sm:$0xff]
        %v1030 = vld [vmem:[#allocation2 + $0x40] sm:$0xff]
        %v1031 = vld [vmem:[#allocation2 + $0x48] sm:$0xff]
        %v1032 = vld [vmem:[#allocation2 + $0x50] sm:$0xff]
        %v1033 = vld [vmem:[#allocation2 + $0x58] sm:$0xff]
        %v1034 = vld [vmem:[#allocation2 + $0x60] sm:$0xff]
        %v1035 = vld [vmem:[#allocation2 + $0x68] sm:$0xff]
        %v1036 = vld [vmem:[#allocation2 + $0x70] sm:$0xff]
        %v1037 = vld [vmem:[#allocation2 + $0x78] sm:$0xff]
        %v1038 = vld [vmem:[#allocation2 + $0x80] sm:$0xff]
        %v1039 = vld [vmem:[#allocation2 + $0x88] sm:$0xff]
        %v1040 = vld [vmem:[#allocation2 + $0x90] sm:$0xff]
        %v1041 = vld [vmem:[#allocation2 + $0x98] sm:$0xff]
        %v1042 = vld [vmem:[#allocation2 + $0xa0] sm:$0xff]
        %v1043 = vld [vmem:[#allocation2 + $0xa8] sm:$0xff]
        %v1044 = vld [vmem:[#allocation2 + $0xb0] sm:$0xff]
        %v1045 = vld [vmem:[#allocation2 + $0xb8] sm:$0xff]
        %v1046 = vld [vmem:[#allocation2 + $0xc0] sm:$0xff]
        %v1047 = vld [vmem:[#allocation2 + $0xc8] sm:$0xff]
        %v1048 = vld [vmem:[#allocation2 + $0xd0] sm:$0xff]
        %v1049 = vld [vmem:[#allocation2 + $0xd8] sm:$0xff]
        %v1050 = vld [vmem:[#allocation2 + $0xe0] sm:$0xff]
        %v1051 = vld [vmem:[#allocation2 + $0xe8] sm:$0xff]
        %v1052 = vld [vmem:[#allocation2 + $0xf0] sm:$0xff]
        %v1053 = vld [vmem:[#allocation2 + $0xf8] sm:$0xff]
        %v1054 = vld [vmem:[#allocation2 + $0x100] sm:$0xff]
        %v1055 = vld [vmem:[#allocation2 + $0x108] sm:$0xff]
        %v1056 = vld [vmem:[#allocation2 + $0x110] sm:$0xff]
        %v1057 = vld [vmem:[#allocation2 + $0x118] sm:$0xff]
        %v1058 = vld [vmem:[#allocation2 + $0x120] sm:$0xff]
        %v1059 = vld [vmem:[#allocation2 + $0x128] sm:$0xff]
        %v1060 = vld [vmem:[#allocation2 + $0x130] sm:$0xff]
        %v1061 = vld [vmem:[#allocation2 + $0x138] sm:$0xff]
        %v1062 = vld [vmem:[#allocation2 + $0x140] sm:$0xff]
        %v1063 = vld [vmem:[#allocation2 + $0x148] sm:$0xff]
        %v1064 = vld [vmem:[#allocation2 + $0x150] sm:$0xff]
        %v1065 = vld [vmem:[#allocation2 + $0x158] sm:$0xff]
        %v1066 = vld [vmem:[#allocation2 + $0x160] sm:$0xff]
        %v1067 = vld [vmem:[#allocation2 + $0x168] sm:$0xff]
        %v1068 = vld [vmem:[#allocation2 + $0x170] sm:$0xff]
        %v1069 = vld [vmem:[#allocation2 + $0x178] sm:$0xff]
        %v1070 = vld [vmem:[#allocation2 + $0x180] sm:$0xff]
        %v1071 = vld [vmem:[#allocation2 + $0x188] sm:$0xff]
        %v1072 = vld [vmem:[#allocation2 + $0x190] sm:$0xff]
        %v1073 = vld [vmem:[#allocation2 + $0x198] sm:$0xff]
        %v1074 = vld [vmem:[#allocation2 + $0x1a0] sm:$0xff]
        %v1075 = vld [vmem:[#allocation2 + $0x1a8] sm:$0xff]
        %v1076 = vld [vmem:[#allocation2 + $0x1b0] sm:$0xff]
        %v1077 = vld [vmem:[#allocation2 + $0x1b8] sm:$0xff]
        %v1078 = vld [vmem:[#allocation2 + $0x1c0] sm:$0xff]
        %v1079 = vld [vmem:[#allocation2 + $0x1c8] sm:$0xff]
        %v1080 = vld [vmem:[#allocation2 + $0x1d0] sm:$0xff]
        %v1081 = vld [vmem:[#allocation2 + $0x1d8] sm:$0xff]
        %v1082 = vld [vmem:[#allocation2 + $0x1e0] sm:$0xff]
        %v1083 = vld [vmem:[#allocation2 + $0x1e8] sm:$0xff]
        %v1084 = vld [vmem:[#allocation2 + $0x1f0] sm:$0xff]
        %v1085 = vld [vmem:[#allocation2 + $0x1f8] sm:$0xff]
        %v1086 = vld [vmem:[%s5] sm:$0xff]
        %v1087 = vld [vmem:[%s5 + $0x8] sm:$0xff]
        %1088 = vmatprep.subr.mxu0 0.0
        %1089 = vmatpush1.msra.mxu0 0.0
        %1090 = vmatprep.subr.mxu0 0.0
        %1091 = vmatpush1.msra.mxu0 0.0
        %1092 = vmatprep.subr.mxu0 0.0
        %1093 = vmatpush1.msra.mxu0 0.0
        %1094 = vmatprep.subr.mxu0 0.0
        %1095 = vmatpush1.msra.mxu0 0.0
        %1096 = vmatprep.subr.mxu0 0.0
        %1097 = vmatpush1.msra.mxu0 0.0
        %1098 = vmatprep.subr.mxu0 0.0
        %1099 = vmatpush1.msra.mxu0 0.0
        %1100 = vmatprep.subr.mxu0 0.0
        %1101 = vmatpush1.msra.mxu0 0.0
        %1102 = vmatprep.subr.mxu0 0.0
        %1103 = vmatpush1.msra.mxu0 0.0
        %1104 = vmatprep.subr.mxu0 0.0
        %1105 = vmatpush1.msra.mxu0 0.0
        %1106 = vmatprep.subr.mxu0 0.0
        %1107 = vmatpush1.msra.mxu0 0.0
        %1108 = vmatprep.subr.mxu0 0.0
        %1109 = vmatpush1.msra.mxu0 0.0
        %1110 = vmatprep.subr.mxu0 0.0
        %1111 = vmatpush1.msra.mxu0 0.0
        %1112 = vmatprep.subr.mxu0 0.0
        %1113 = vmatpush1.msra.mxu0 0.0
        %1114 = vmatprep.subr.mxu0 0.0
        %1115 = vmatpush1.msra.mxu0 0.0
        %1116 = vmatprep.subr.mxu0 0.0
        %1117 = vmatpush1.msra.mxu0 0.0
        %1118 = vmatprep.subr.mxu0 %v1087
        %1119 = vmatpush1.msra.mxu0 %v1086
        %1120 = vmatprep.subr.mxu0 0.0
        %1121 = vmatpush2.msra.mxu0 0.0
        %1122 = vmatprep.subr.mxu0 0.0
        %1123 = vmatpush2.msra.mxu0 0.0
        %1124 = vmatprep.subr.mxu0 0.0
        %1125 = vmatpush2.msra.mxu0 0.0
        %1126 = vmatprep.subr.mxu0 0.0
        %1127 = vmatpush2.msra.mxu0 0.0
        %1128 = vmatprep.subr.mxu0 0.0
        %1129 = vmatpush2.msra.mxu0 0.0
        %1130 = vmatprep.subr.mxu0 0.0
        %1131 = vmatpush2.msra.mxu0 0.0
        %1132 = vmatprep.subr.mxu0 0.0
        %1133 = vmatpush2.msra.mxu0 0.0
        %1134 = vmatprep.subr.mxu0 0.0
        %1135 = vmatpush2.msra.mxu0 0.0
        %1136 = vmatprep.subr.mxu0 0.0
        %1137 = vmatpush2.msra.mxu0 0.0
        %1138 = vmatprep.subr.mxu0 0.0
        %1139 = vmatpush2.msra.mxu0 0.0
        %1140 = vmatprep.subr.mxu0 0.0
        %1141 = vmatpush2.msra.mxu0 0.0
        %1142 = vmatprep.subr.mxu0 0.0
        %1143 = vmatpush2.msra.mxu0 0.0
        %1144 = vmatprep.subr.mxu0 0.0
        %1145 = vmatpush2.msra.mxu0 0.0
        %1146 = vmatprep.subr.mxu0 0.0
        %1147 = vmatpush2.msra.mxu0 0.0
        %1148 = vmatprep.subr.mxu0 0.0
        %1149 = vmatpush2.msra.mxu0 0.0
        %1150 = vmatprep.subr.mxu0 0.0
        %1151 = vmatpush2.msra.mxu0 0.0
        %1152 = vmatprep.mubr.f32.mxu0 0.0
        %1153 = vmatmul.mubr.f32.gmra.mxu0 %v418
        %v1154 = vpop.f32.mrf.mxu0
        %v1155 = vadd.f32 0.0, %v1154
        %v1156 = vpop.f32.mrf.mxu0
        %v1157 = vadd.f32 0.0, %v1156
        %1158 = vmatprep.mubr.f32.mxu0 0.0
        %1159 = vmatmul.mubr.f32.gmra.mxu0 %v421
        %v1160 = vpop.f32.mrf.mxu0
        %v1161 = vadd.f32 0.0, %v1160
        %v1162 = vpop.f32.mrf.mxu0
        %v1163 = vadd.f32 0.0, %v1162
        %1164 = vmatprep.mubr.f32.mxu0 0.0
        %1165 = vmatmul.mubr.f32.gmra.mxu0 %v424
        %v1166 = vpop.f32.mrf.mxu0
        %v1167 = vadd.f32 0.0, %v1166
        %v1168 = vpop.f32.mrf.mxu0
        %v1169 = vadd.f32 0.0, %v1168
        %1170 = vmatprep.mubr.f32.mxu0 0.0
        %1171 = vmatmul.mubr.f32.gmra.mxu0 %v427
        %v1172 = vpop.f32.mrf.mxu0
        %v1173 = vadd.f32 0.0, %v1172
        %v1174 = vpop.f32.mrf.mxu0
        %v1175 = vadd.f32 0.0, %v1174
        %1176 = vmatprep.mubr.f32.mxu0 0.0
        %1177 = vmatmul.mubr.f32.gmra.mxu0 %v430
        %v1178 = vpop.f32.mrf.mxu0
        %v1179 = vadd.f32 0.0, %v1178
        %v1180 = vpop.f32.mrf.mxu0
        %v1181 = vadd.f32 0.0, %v1180
        %1182 = vmatprep.mubr.f32.mxu0 0.0
        %1183 = vmatmul.mubr.f32.gmra.mxu0 %v433
        %v1184 = vpop.f32.mrf.mxu0
        %v1185 = vadd.f32 0.0, %v1184
        %v1186 = vpop.f32.mrf.mxu0
        %v1187 = vadd.f32 0.0, %v1186
        %1188 = vmatprep.mubr.f32.mxu0 0.0
        %1189 = vmatmul.mubr.f32.gmra.mxu0 %v436
        %v1190 = vpop.f32.mrf.mxu0
        %v1191 = vadd.f32 0.0, %v1190
        %v1192 = vpop.f32.mrf.mxu0
        %v1193 = vadd.f32 0.0, %v1192
        %1194 = vmatprep.mubr.f32.mxu0 0.0
        %1195 = vmatmul.mubr.f32.gmra.mxu0 %v439
        %v1196 = vpop.f32.mrf.mxu0
        %v1197 = vadd.f32 0.0, %v1196
        %v1198 = vpop.f32.mrf.mxu0
        %v1199 = vadd.f32 0.0, %v1198
        %1200 = vmatprep.mubr.f32.mxu0 0.0
        %1201 = vmatmul.mubr.f32.gmra.mxu0 %v442
        %v1202 = vpop.f32.mrf.mxu0
        %v1203 = vadd.f32 0.0, %v1202
        %v1204 = vpop.f32.mrf.mxu0
        %v1205 = vadd.f32 0.0, %v1204
        %1206 = vmatprep.mubr.f32.mxu0 0.0
        %1207 = vmatmul.mubr.f32.gmra.mxu0 %v445
        %v1208 = vpop.f32.mrf.mxu0
        %v1209 = vadd.f32 0.0, %v1208
        %v1210 = vpop.f32.mrf.mxu0
        %v1211 = vadd.f32 0.0, %v1210
        %1212 = vmatprep.mubr.f32.mxu0 0.0
        %1213 = vmatmul.mubr.f32.gmra.mxu0 %v448
        %v1214 = vpop.f32.mrf.mxu0
        %v1215 = vadd.f32 0.0, %v1214
        %v1216 = vpop.f32.mrf.mxu0
        %v1217 = vadd.f32 0.0, %v1216
        %1218 = vmatprep.mubr.f32.mxu0 0.0
        %1219 = vmatmul.mubr.f32.gmra.mxu0 %v451
        %v1220 = vpop.f32.mrf.mxu0
        %v1221 = vadd.f32 0.0, %v1220
        %v1222 = vpop.f32.mrf.mxu0
        %v1223 = vadd.f32 0.0, %v1222
        %1224 = vmatprep.mubr.f32.mxu0 0.0
        %1225 = vmatmul.mubr.f32.gmra.mxu0 %v454
        %v1226 = vpop.f32.mrf.mxu0
        %v1227 = vadd.f32 0.0, %v1226
        %v1228 = vpop.f32.mrf.mxu0
        %v1229 = vadd.f32 0.0, %v1228
        %1230 = vmatprep.mubr.f32.mxu0 0.0
        %1231 = vmatmul.mubr.f32.gmra.mxu0 %v457
        %v1232 = vpop.f32.mrf.mxu0
        %v1233 = vadd.f32 0.0, %v1232
        %v1234 = vpop.f32.mrf.mxu0
        %v1235 = vadd.f32 0.0, %v1234
        %1236 = vmatprep.mubr.f32.mxu0 0.0
        %1237 = vmatmul.mubr.f32.gmra.mxu0 %v460
        %v1238 = vpop.f32.mrf.mxu0
        %v1239 = vadd.f32 0.0, %v1238
        %v1240 = vpop.f32.mrf.mxu0
        %v1241 = vadd.f32 0.0, %v1240
        %1242 = vmatprep.mubr.f32.mxu0 0.0
        %1243 = vmatmul.mubr.f32.gmra.mxu0 %v463
        %v1244 = vpop.f32.mrf.mxu0
        %v1245 = vadd.f32 0.0, %v1244
        %v1246 = vpop.f32.mrf.mxu0
        %v1247 = vadd.f32 0.0, %v1246
        %1248 = vmatprep.mubr.f32.mxu0 0.0
        %1249 = vmatmul.mubr.f32.gmra.mxu0 %v466
        %v1250 = vpop.f32.mrf.mxu0
        %v1251 = vadd.f32 0.0, %v1250
        %v1252 = vpop.f32.mrf.mxu0
        %v1253 = vadd.f32 0.0, %v1252
        %1254 = vmatprep.mubr.f32.mxu0 0.0
        %1255 = vmatmul.mubr.f32.gmra.mxu0 %v469
        %v1256 = vpop.f32.mrf.mxu0
        %v1257 = vadd.f32 0.0, %v1256
        %v1258 = vpop.f32.mrf.mxu0
        %v1259 = vadd.f32 0.0, %v1258
        %1260 = vmatprep.mubr.f32.mxu0 0.0
        %1261 = vmatmul.mubr.f32.gmra.mxu0 %v472
        %v1262 = vpop.f32.mrf.mxu0
        %v1263 = vadd.f32 0.0, %v1262
        %v1264 = vpop.f32.mrf.mxu0
        %v1265 = vadd.f32 0.0, %v1264
        %1266 = vmatprep.mubr.f32.mxu0 0.0
        %1267 = vmatmul.mubr.f32.gmra.mxu0 %v475
        %v1268 = vpop.f32.mrf.mxu0
        %v1269 = vadd.f32 0.0, %v1268
        %v1270 = vpop.f32.mrf.mxu0
        %v1271 = vadd.f32 0.0, %v1270
        %1272 = vmatprep.mubr.f32.mxu0 0.0
        %1273 = vmatmul.mubr.f32.gmra.mxu0 %v478
        %v1274 = vpop.f32.mrf.mxu0
        %v1275 = vadd.f32 0.0, %v1274
        %v1276 = vpop.f32.mrf.mxu0
        %v1277 = vadd.f32 0.0, %v1276
        %1278 = vdwg.mxu0
        %1279 = vmatprep.subr.mxu0 %v1053
        %1280 = vmatpush1.msra.mxu0 %v1052
        %1281 = vmatprep.subr.mxu0 %v1051
        %1282 = vmatpush1.msra.mxu0 %v1050
        %1283 = vmatprep.subr.mxu0 %v1049
        %1284 = vmatpush1.msra.mxu0 %v1048
        %1285 = vmatprep.subr.mxu0 %v1047
        %1286 = vmatpush1.msra.mxu0 %v1046
        %1287 = vmatprep.subr.mxu0 %v1045
        %1288 = vmatpush1.msra.mxu0 %v1044
        %1289 = vmatprep.subr.mxu0 %v1043
        %1290 = vmatpush1.msra.mxu0 %v1042
        %1291 = vmatprep.subr.mxu0 %v1041
        %1292 = vmatpush1.msra.mxu0 %v1040
        %1293 = vmatprep.subr.mxu0 %v1039
        %1294 = vmatpush1.msra.mxu0 %v1038
        %1295 = vmatprep.subr.mxu0 %v1037
        %1296 = vmatpush1.msra.mxu0 %v1036
        %1297 = vmatprep.subr.mxu0 %v1035
        %1298 = vmatpush1.msra.mxu0 %v1034
        %1299 = vmatprep.subr.mxu0 %v1033
        %1300 = vmatpush1.msra.mxu0 %v1032
        %1301 = vmatprep.subr.mxu0 %v1031
        %1302 = vmatpush1.msra.mxu0 %v1030
        %1303 = vmatprep.subr.mxu0 %v1029
        %1304 = vmatpush1.msra.mxu0 %v1028
        %1305 = vmatprep.subr.mxu0 %v1027
        %1306 = vmatpush1.msra.mxu0 %v1026
        %1307 = vmatprep.subr.mxu0 %v1025
        %1308 = vmatpush1.msra.mxu0 %v1024
        %1309 = vmatprep.subr.mxu0 %v1023
        %1310 = vmatpush1.msra.mxu0 %v1022
        %1311 = vmatprep.subr.mxu0 %v1085
        %1312 = vmatpush2.msra.mxu0 %v1084
        %1313 = vmatprep.subr.mxu0 %v1083
        %1314 = vmatpush2.msra.mxu0 %v1082
        %1315 = vmatprep.subr.mxu0 %v1081
        %1316 = vmatpush2.msra.mxu0 %v1080
        %1317 = vmatprep.subr.mxu0 %v1079
        %1318 = vmatpush2.msra.mxu0 %v1078
        %1319 = vmatprep.subr.mxu0 %v1077
        %1320 = vmatpush2.msra.mxu0 %v1076
        %1321 = vmatprep.subr.mxu0 %v1075
        %1322 = vmatpush2.msra.mxu0 %v1074
        %1323 = vmatprep.subr.mxu0 %v1073
        %1324 = vmatpush2.msra.mxu0 %v1072
        %1325 = vmatprep.subr.mxu0 %v1071
        %1326 = vmatpush2.msra.mxu0 %v1070
        %1327 = vmatprep.subr.mxu0 %v1069
        %1328 = vmatpush2.msra.mxu0 %v1068
        %1329 = vmatprep.subr.mxu0 %v1067
        %1330 = vmatpush2.msra.mxu0 %v1066
        %1331 = vmatprep.subr.mxu0 %v1065
        %1332 = vmatpush2.msra.mxu0 %v1064
        %1333 = vmatprep.subr.mxu0 %v1063
        %1334 = vmatpush2.msra.mxu0 %v1062
        %1335 = vmatprep.subr.mxu0 %v1061
        %1336 = vmatpush2.msra.mxu0 %v1060
        %1337 = vmatprep.subr.mxu0 %v1059
        %1338 = vmatpush2.msra.mxu0 %v1058
        %1339 = vmatprep.subr.mxu0 %v1057
        %1340 = vmatpush2.msra.mxu0 %v1056
        %1341 = vmatprep.subr.mxu0 %v1055
        %1342 = vmatpush2.msra.mxu0 %v1054
        %1343 = vmatprep.mubr.f32.mxu0 %v981
        %1344 = vmatmul.mubr.f32.gmra.mxu0 %v980
        %v1345 = vpop.f32.mrf.mxu0
        %v1346 = vadd.f32 %v1155, %v1345
        %v1347 = vpop.f32.mrf.mxu0
        %v1348 = vadd.f32 %v1157, %v1347
        %1349 = vmatprep.mubr.f32.mxu0 %v983
        %1350 = vmatmul.mubr.f32.gmra.mxu0 %v982
        %v1351 = vpop.f32.mrf.mxu0
        %v1352 = vadd.f32 %v1161, %v1351
        %v1353 = vpop.f32.mrf.mxu0
        %v1354 = vadd.f32 %v1163, %v1353
        %1355 = vmatprep.mubr.f32.mxu0 %v985
        %1356 = vmatmul.mubr.f32.gmra.mxu0 %v984
        %v1357 = vpop.f32.mrf.mxu0
        %v1358 = vadd.f32 %v1167, %v1357
        %v1359 = vpop.f32.mrf.mxu0
        %v1360 = vadd.f32 %v1169, %v1359
        %1361 = vmatprep.mubr.f32.mxu0 %v987
        %1362 = vmatmul.mubr.f32.gmra.mxu0 %v986
        %v1363 = vpop.f32.mrf.mxu0
        %v1364 = vadd.f32 %v1173, %v1363
        %v1365 = vpop.f32.mrf.mxu0
        %v1366 = vadd.f32 %v1175, %v1365
        %1367 = vmatprep.mubr.f32.mxu0 %v989
        %1368 = vmatmul.mubr.f32.gmra.mxu0 %v988
        %v1369 = vpop.f32.mrf.mxu0
        %v1370 = vadd.f32 %v1179, %v1369
        %v1371 = vpop.f32.mrf.mxu0
        %v1372 = vadd.f32 %v1181, %v1371
        %1373 = vmatprep.mubr.f32.mxu0 %v991
        %1374 = vmatmul.mubr.f32.gmra.mxu0 %v990
        %v1375 = vpop.f32.mrf.mxu0
        %v1376 = vadd.f32 %v1185, %v1375
        %v1377 = vpop.f32.mrf.mxu0
        %v1378 = vadd.f32 %v1187, %v1377
        %1379 = vmatprep.mubr.f32.mxu0 %v993
        %1380 = vmatmul.mubr.f32.gmra.mxu0 %v992
        %v1381 = vpop.f32.mrf.mxu0
        %v1382 = vadd.f32 %v1191, %v1381
        %v1383 = vpop.f32.mrf.mxu0
        %v1384 = vadd.f32 %v1193, %v1383
        %1385 = vmatprep.mubr.f32.mxu0 %v995
        %1386 = vmatmul.mubr.f32.gmra.mxu0 %v994
        %v1387 = vpop.f32.mrf.mxu0
        %v1388 = vadd.f32 %v1197, %v1387
        %v1389 = vpop.f32.mrf.mxu0
        %v1390 = vadd.f32 %v1199, %v1389
        %1391 = vmatprep.mubr.f32.mxu0 %v997
        %1392 = vmatmul.mubr.f32.gmra.mxu0 %v996
        %v1393 = vpop.f32.mrf.mxu0
        %v1394 = vadd.f32 %v1203, %v1393
        %v1395 = vpop.f32.mrf.mxu0
        %v1396 = vadd.f32 %v1205, %v1395
        %1397 = vmatprep.mubr.f32.mxu0 %v999
        %1398 = vmatmul.mubr.f32.gmra.mxu0 %v998
        %v1399 = vpop.f32.mrf.mxu0
        %v1400 = vadd.f32 %v1209, %v1399
        %v1401 = vpop.f32.mrf.mxu0
        %v1402 = vadd.f32 %v1211, %v1401
        %1403 = vmatprep.mubr.f32.mxu0 %v1001
        %1404 = vmatmul.mubr.f32.gmra.mxu0 %v1000
        %v1405 = vpop.f32.mrf.mxu0
        %v1406 = vadd.f32 %v1215, %v1405
        %v1407 = vpop.f32.mrf.mxu0
        %v1408 = vadd.f32 %v1217, %v1407
        %1409 = vmatprep.mubr.f32.mxu0 %v1003
        %1410 = vmatmul.mubr.f32.gmra.mxu0 %v1002
        %v1411 = vpop.f32.mrf.mxu0
        %v1412 = vadd.f32 %v1221, %v1411
        %v1413 = vpop.f32.mrf.mxu0
        %v1414 = vadd.f32 %v1223, %v1413
        %1415 = vmatprep.mubr.f32.mxu0 %v1005
        %1416 = vmatmul.mubr.f32.gmra.mxu0 %v1004
        %v1417 = vpop.f32.mrf.mxu0
        %v1418 = vadd.f32 %v1227, %v1417
        %v1419 = vpop.f32.mrf.mxu0
        %v1420 = vadd.f32 %v1229, %v1419
        %1421 = vmatprep.mubr.f32.mxu0 %v1007
        %1422 = vmatmul.mubr.f32.gmra.mxu0 %v1006
        %v1423 = vpop.f32.mrf.mxu0
        %v1424 = vadd.f32 %v1233, %v1423
        %v1425 = vpop.f32.mrf.mxu0
        %v1426 = vadd.f32 %v1235, %v1425
        %1427 = vmatprep.mubr.f32.mxu0 %v1009
        %1428 = vmatmul.mubr.f32.gmra.mxu0 %v1008
        %v1429 = vpop.f32.mrf.mxu0
        %v1430 = vadd.f32 %v1239, %v1429
        %v1431 = vpop.f32.mrf.mxu0
        %v1432 = vadd.f32 %v1241, %v1431
        %1433 = vmatprep.mubr.f32.mxu0 %v1011
        %1434 = vmatmul.mubr.f32.gmra.mxu0 %v1010
        %v1435 = vpop.f32.mrf.mxu0
        %v1436 = vadd.f32 %v1245, %v1435
        %v1437 = vpop.f32.mrf.mxu0
        %v1438 = vadd.f32 %v1247, %v1437
        %1439 = vmatprep.mubr.f32.mxu0 %v1013
        %1440 = vmatmul.mubr.f32.gmra.mxu0 %v1012
        %v1441 = vpop.f32.mrf.mxu0
        %v1442 = vadd.f32 %v1251, %v1441
        %v1443 = vpop.f32.mrf.mxu0
        %v1444 = vadd.f32 %v1253, %v1443
        %1445 = vmatprep.mubr.f32.mxu0 %v1015
        %1446 = vmatmul.mubr.f32.gmra.mxu0 %v1014
        %v1447 = vpop.f32.mrf.mxu0
        %v1448 = vadd.f32 %v1257, %v1447
        %v1449 = vpop.f32.mrf.mxu0
        %v1450 = vadd.f32 %v1259, %v1449
        %1451 = vmatprep.mubr.f32.mxu0 %v1017
        %1452 = vmatmul.mubr.f32.gmra.mxu0 %v1016
        %v1453 = vpop.f32.mrf.mxu0
        %v1454 = vadd.f32 %v1263, %v1453
        %v1455 = vpop.f32.mrf.mxu0
        %v1456 = vadd.f32 %v1265, %v1455
        %1457 = vmatprep.mubr.f32.mxu0 %v1019
        %1458 = vmatmul.mubr.f32.gmra.mxu0 %v1018
        %v1459 = vpop.f32.mrf.mxu0
        %v1460 = vadd.f32 %v1269, %v1459
        %v1461 = vpop.f32.mrf.mxu0
        %v1462 = vadd.f32 %v1271, %v1461
        %1463 = vmatprep.mubr.f32.mxu0 %v1021
        %1464 = vmatmul.mubr.f32.gmra.mxu0 %v1020
        %v1465 = vpop.f32.mrf.mxu0
        %v1466 = vadd.f32 %v1275, %v1465
        %v1467 = vpop.f32.mrf.mxu0
        %v1468 = vadd.f32 %v1277, %v1467
        %1469 = vdwg.mxu0
        %v1470 = vtanh.pop %v1346
        %v1471 = vtanh.pop %v1348
        %v1472 = vtanh.pop %v1352
        %v1473 = vtanh.pop %v1354
        %v1474 = vtanh.pop %v1358
        %v1475 = vtanh.pop %v1360
        %v1476 = vtanh.pop %v1364
        %v1477 = vtanh.pop %v1366
        %v1478 = vtanh.pop %v1370
        %v1479 = vtanh.pop %v1372
        %v1480 = vtanh.pop %v1376
        %v1481 = vtanh.pop %v1378
        %v1482 = vtanh.pop %v1382
        %v1483 = vtanh.pop %v1384
        %v1484 = vtanh.pop %v1388
        %v1485 = vtanh.pop %v1390
        %v1486 = vtanh.pop %v1394
        %v1487 = vtanh.pop %v1396
        %v1488 = vtanh.pop %v1400
        %v1489 = vtanh.pop %v1402
        %v1490 = vtanh.pop %v1406
        %v1491 = vtanh.pop %v1408
        %v1492 = vtanh.pop %v1412
        %v1493 = vtanh.pop %v1414
        %v1494 = vtanh.pop %v1418
        %v1495 = vtanh.pop %v1420
        %v1496 = vtanh.pop %v1424
        %v1497 = vtanh.pop %v1426
        %v1498 = vtanh.pop %v1430
        %v1499 = vtanh.pop %v1432
        %v1500 = vtanh.pop %v1436
        %v1501 = vtanh.pop %v1438
        %v1502 = vtanh.pop %v1442
        %v1503 = vtanh.pop %v1444
        %v1504 = vtanh.pop %v1448
        %v1505 = vtanh.pop %v1450
        %v1506 = vtanh.pop %v1454
        %v1507 = vtanh.pop %v1456
        %v1508 = vtanh.pop %v1460
        %v1509 = vtanh.pop %v1462
        %v1510 = vtanh.pop %v1466
        %v1511 = vtanh.pop %v1468
        %v1512 = vld [vmem:[#allocation4] sm:$0xff]
        %v1513 = vld [vmem:[#allocation4 + $0x8] sm:$0xff]
        %v1514 = vld [vmem:[#allocation4 + $0x10] sm:$0xff]
        %v1515 = vld [vmem:[#allocation4 + $0x18] sm:$0xff]
        %v1516 = vld [vmem:[#allocation4 + $0x20] sm:$0xff]
        %v1517 = vld [vmem:[#allocation4 + $0x28] sm:$0xff]
        %v1518 = vld [vmem:[#allocation4 + $0x30] sm:$0xff]
        %v1519 = vld [vmem:[#allocation4 + $0x38] sm:$0xff]
        %v1520 = vld [vmem:[#allocation4 + $0x40] sm:$0xff]
        %v1521 = vld [vmem:[#allocation4 + $0x48] sm:$0xff]
        %v1522 = vld [vmem:[#allocation4 + $0x50] sm:$0xff]
        %v1523 = vld [vmem:[#allocation4 + $0x58] sm:$0xff]
        %v1524 = vld [vmem:[#allocation4 + $0x60] sm:$0xff]
        %v1525 = vld [vmem:[#allocation4 + $0x68] sm:$0xff]
        %v1526 = vld [vmem:[#allocation4 + $0x70] sm:$0xff]
        %v1527 = vld [vmem:[#allocation4 + $0x78] sm:$0xff]
        %v1528 = vld [vmem:[#allocation4 + $0x80] sm:$0xff]
        %v1529 = vld [vmem:[#allocation4 + $0x88] sm:$0xff]
        %v1530 = vld [vmem:[#allocation4 + $0x90] sm:$0xff]
        %v1531 = vld [vmem:[#allocation4 + $0x98] sm:$0xff]
        %v1532 = vld [vmem:[#allocation4 + $0xa0] sm:$0xff]
        %v1533 = vld [vmem:[#allocation4 + $0xa8] sm:$0xff]
        %v1534 = vld [vmem:[#allocation4 + $0xb0] sm:$0xff]
        %v1535 = vld [vmem:[#allocation4 + $0xb8] sm:$0xff]
        %v1536 = vld [vmem:[#allocation4 + $0xc0] sm:$0xff]
        %v1537 = vld [vmem:[#allocation4 + $0xc8] sm:$0xff]
        %v1538 = vld [vmem:[#allocation4 + $0xd0] sm:$0xff]
        %v1539 = vld [vmem:[#allocation4 + $0xd8] sm:$0xff]
        %v1540 = vld [vmem:[#allocation4 + $0xe0] sm:$0xff]
        %v1541 = vld [vmem:[#allocation4 + $0xe8] sm:$0xff]
        %v1542 = vld [vmem:[#allocation4 + $0xf0] sm:$0xff]
        %v1543 = vld [vmem:[#allocation4 + $0xf8] sm:$0xff]
        %v1544 = vld [vmem:[#allocation4 + $0x100] sm:$0xff]
        %v1545 = vld [vmem:[#allocation4 + $0x108] sm:$0xff]
        %v1546 = vld [vmem:[#allocation4 + $0x110] sm:$0xff]
        %v1547 = vld [vmem:[#allocation4 + $0x118] sm:$0xff]
        %v1548 = vld [vmem:[#allocation4 + $0x120] sm:$0xff]
        %v1549 = vld [vmem:[#allocation4 + $0x128] sm:$0xff]
        %v1550 = vld [vmem:[#allocation4 + $0x130] sm:$0xff]
        %v1551 = vld [vmem:[#allocation4 + $0x138] sm:$0xff]
        %v1552 = vld [vmem:[#allocation4 + $0x140] sm:$0xff]
        %v1553 = vld [vmem:[#allocation4 + $0x148] sm:$0xff]
        %v1554 = vld [vmem:[#allocation4 + $0x150] sm:$0xff]
        %v1555 = vld [vmem:[#allocation4 + $0x158] sm:$0xff]
        %v1556 = vld [vmem:[#allocation4 + $0x160] sm:$0xff]
        %v1557 = vld [vmem:[#allocation4 + $0x168] sm:$0xff]
        %v1558 = vld [vmem:[#allocation4 + $0x170] sm:$0xff]
        %v1559 = vld [vmem:[#allocation4 + $0x178] sm:$0xff]
        %v1560 = vld [vmem:[#allocation4 + $0x180] sm:$0xff]
        %v1561 = vld [vmem:[#allocation4 + $0x188] sm:$0xff]
        %v1562 = vld [vmem:[#allocation4 + $0x190] sm:$0xff]
        %v1563 = vld [vmem:[#allocation4 + $0x198] sm:$0xff]
        %v1564 = vld [vmem:[#allocation4 + $0x1a0] sm:$0xff]
        %v1565 = vld [vmem:[#allocation4 + $0x1a8] sm:$0xff]
        %v1566 = vld [vmem:[#allocation4 + $0x1b0] sm:$0xff]
        %v1567 = vld [vmem:[#allocation4 + $0x1b8] sm:$0xff]
        %v1568 = vld [vmem:[#allocation4 + $0x1c0] sm:$0xff]
        %v1569 = vld [vmem:[#allocation4 + $0x1c8] sm:$0xff]
        %v1570 = vld [vmem:[#allocation4 + $0x1d0] sm:$0xff]
        %v1571 = vld [vmem:[#allocation4 + $0x1d8] sm:$0xff]
        %v1572 = vld [vmem:[#allocation4 + $0x1e0] sm:$0xff]
        %v1573 = vld [vmem:[#allocation4 + $0x1e8] sm:$0xff]
        %v1574 = vld [vmem:[#allocation4 + $0x1f0] sm:$0xff]
        %v1575 = vld [vmem:[#allocation4 + $0x1f8] sm:$0xff]
        %v1576 = vld [vmem:[%s7] sm:$0x3]
        %v1578 = vlaneseq
        %v1579 = vshrl.u32 %v1578, 7
        %v1580 = vsub.s32 0, %v1579
        %v1581 = vrot.slane %v1576, %v1580
        %v1582 = vlaneseq
        %v1583 = vshrl.u32 %v1582, 7
        %v1584 = vsub.s32 1, %v1583
        %v1585 = vrot.slane %v1576, %v1584
        %1588 = vmatprep.subr.mxu0 %v1543
        %1589 = vmatpush1.msra.mxu0 %v1542
        %1590 = vmatprep.subr.mxu0 %v1541
        %1591 = vmatpush1.msra.mxu0 %v1540
        %1592 = vmatprep.subr.mxu0 %v1539
        %1593 = vmatpush1.msra.mxu0 %v1538
        %1594 = vmatprep.subr.mxu0 %v1537
        %1595 = vmatpush1.msra.mxu0 %v1536
        %1596 = vmatprep.subr.mxu0 %v1535
        %1597 = vmatpush1.msra.mxu0 %v1534
        %1598 = vmatprep.subr.mxu0 %v1533
        %1599 = vmatpush1.msra.mxu0 %v1532
        %1600 = vmatprep.subr.mxu0 %v1531
        %1601 = vmatpush1.msra.mxu0 %v1530
        %1602 = vmatprep.subr.mxu0 %v1529
        %1603 = vmatpush1.msra.mxu0 %v1528
        %1604 = vmatprep.subr.mxu0 %v1527
        %1605 = vmatpush1.msra.mxu0 %v1526
        %1606 = vmatprep.subr.mxu0 %v1525
        %1607 = vmatpush1.msra.mxu0 %v1524
        %1608 = vmatprep.subr.mxu0 %v1523
        %1609 = vmatpush1.msra.mxu0 %v1522
        %1610 = vmatprep.subr.mxu0 %v1521
        %1611 = vmatpush1.msra.mxu0 %v1520
        %1612 = vmatprep.subr.mxu0 %v1519
        %1613 = vmatpush1.msra.mxu0 %v1518
        %1614 = vmatprep.subr.mxu0 %v1517
        %1615 = vmatpush1.msra.mxu0 %v1516
        %1616 = vmatprep.subr.mxu0 %v1515
        %1617 = vmatpush1.msra.mxu0 %v1514
        %1618 = vmatprep.subr.mxu0 %v1513
        %1619 = vmatpush1.msra.mxu0 %v1512
        %1620 = vmatprep.subr.mxu0 %v1575
        %1621 = vmatpush2.msra.mxu0 %v1574
        %1622 = vmatprep.subr.mxu0 %v1573
        %1623 = vmatpush2.msra.mxu0 %v1572
        %1624 = vmatprep.subr.mxu0 %v1571
        %1625 = vmatpush2.msra.mxu0 %v1570
        %1626 = vmatprep.subr.mxu0 %v1569
        %1627 = vmatpush2.msra.mxu0 %v1568
        %1628 = vmatprep.subr.mxu0 %v1567
        %1629 = vmatpush2.msra.mxu0 %v1566
        %1630 = vmatprep.subr.mxu0 %v1565
        %1631 = vmatpush2.msra.mxu0 %v1564
        %1632 = vmatprep.subr.mxu0 %v1563
        %1633 = vmatpush2.msra.mxu0 %v1562
        %1634 = vmatprep.subr.mxu0 %v1561
        %1635 = vmatpush2.msra.mxu0 %v1560
        %1636 = vmatprep.subr.mxu0 %v1559
        %1637 = vmatpush2.msra.mxu0 %v1558
        %1638 = vmatprep.subr.mxu0 %v1557
        %1639 = vmatpush2.msra.mxu0 %v1556
        %1640 = vmatprep.subr.mxu0 %v1555
        %1641 = vmatpush2.msra.mxu0 %v1554
        %1642 = vmatprep.subr.mxu0 %v1553
        %1643 = vmatpush2.msra.mxu0 %v1552
        %1644 = vmatprep.subr.mxu0 %v1551
        %1645 = vmatpush2.msra.mxu0 %v1550
        %1646 = vmatprep.subr.mxu0 %v1549
        %1647 = vmatpush2.msra.mxu0 %v1548
        %1648 = vmatprep.subr.mxu0 %v1547
        %1649 = vmatpush2.msra.mxu0 %v1546
        %1650 = vmatprep.subr.mxu0 %v1545
        %1651 = vmatpush2.msra.mxu0 %v1544
        %1652 = vmatprep.mubr.f32.mxu0 %v1471
        %1653 = vmatmul.mubr.f32.gmra.mxu0 %v1470
        %v1654 = vpop.f32.mrf.mxu0
        %v1655 = vadd.f32 %v1581, %v1654
        %v1656 = vpop.f32.mrf.mxu0
        %v1657 = vadd.f32 %v1585, %v1656
        %1658 = vmatprep.mubr.f32.mxu0 %v1473
        %1659 = vmatmul.mubr.f32.gmra.mxu0 %v1472
        %v1660 = vpop.f32.mrf.mxu0
        %v1661 = vadd.f32 %v1581, %v1660
        %v1662 = vpop.f32.mrf.mxu0
        %v1663 = vadd.f32 %v1585, %v1662
        %1664 = vmatprep.mubr.f32.mxu0 %v1475
        %1665 = vmatmul.mubr.f32.gmra.mxu0 %v1474
        %v1666 = vpop.f32.mrf.mxu0
        %v1667 = vadd.f32 %v1581, %v1666
        %v1668 = vpop.f32.mrf.mxu0
        %v1669 = vadd.f32 %v1585, %v1668
        %1670 = vmatprep.mubr.f32.mxu0 %v1477
        %1671 = vmatmul.mubr.f32.gmra.mxu0 %v1476
        %v1672 = vpop.f32.mrf.mxu0
        %v1673 = vadd.f32 %v1581, %v1672
        %v1674 = vpop.f32.mrf.mxu0
        %v1675 = vadd.f32 %v1585, %v1674
        %1676 = vmatprep.mubr.f32.mxu0 %v1479
        %1677 = vmatmul.mubr.f32.gmra.mxu0 %v1478
        %v1678 = vpop.f32.mrf.mxu0
        %v1679 = vadd.f32 %v1581, %v1678
        %v1680 = vpop.f32.mrf.mxu0
        %v1681 = vadd.f32 %v1585, %v1680
        %1682 = vmatprep.mubr.f32.mxu0 %v1481
        %1683 = vmatmul.mubr.f32.gmra.mxu0 %v1480
        %v1684 = vpop.f32.mrf.mxu0
        %v1685 = vadd.f32 %v1581, %v1684
        %v1686 = vpop.f32.mrf.mxu0
        %v1687 = vadd.f32 %v1585, %v1686
        %1688 = vmatprep.mubr.f32.mxu0 %v1483
        %1689 = vmatmul.mubr.f32.gmra.mxu0 %v1482
        %v1690 = vpop.f32.mrf.mxu0
        %v1691 = vadd.f32 %v1581, %v1690
        %v1692 = vpop.f32.mrf.mxu0
        %v1693 = vadd.f32 %v1585, %v1692
        %1694 = vmatprep.mubr.f32.mxu0 %v1485
        %1695 = vmatmul.mubr.f32.gmra.mxu0 %v1484
        %v1696 = vpop.f32.mrf.mxu0
        %v1697 = vadd.f32 %v1581, %v1696
        %v1698 = vpop.f32.mrf.mxu0
        %v1699 = vadd.f32 %v1585, %v1698
        %1700 = vmatprep.mubr.f32.mxu0 %v1487
        %1701 = vmatmul.mubr.f32.gmra.mxu0 %v1486
        %v1702 = vpop.f32.mrf.mxu0
        %v1703 = vadd.f32 %v1581, %v1702
        %v1704 = vpop.f32.mrf.mxu0
        %v1705 = vadd.f32 %v1585, %v1704
        %1706 = vmatprep.mubr.f32.mxu0 %v1489
        %1707 = vmatmul.mubr.f32.gmra.mxu0 %v1488
        %v1708 = vpop.f32.mrf.mxu0
        %v1709 = vadd.f32 %v1581, %v1708
        %v1710 = vpop.f32.mrf.mxu0
        %v1711 = vadd.f32 %v1585, %v1710
        %1712 = vmatprep.mubr.f32.mxu0 %v1491
        %1713 = vmatmul.mubr.f32.gmra.mxu0 %v1490
        %v1714 = vpop.f32.mrf.mxu0
        %v1715 = vadd.f32 %v1581, %v1714
        %v1716 = vpop.f32.mrf.mxu0
        %v1717 = vadd.f32 %v1585, %v1716
        %1718 = vmatprep.mubr.f32.mxu0 %v1493
        %1719 = vmatmul.mubr.f32.gmra.mxu0 %v1492
        %v1720 = vpop.f32.mrf.mxu0
        %v1721 = vadd.f32 %v1581, %v1720
        %v1722 = vpop.f32.mrf.mxu0
        %v1723 = vadd.f32 %v1585, %v1722
        %1724 = vmatprep.mubr.f32.mxu0 %v1495
        %1725 = vmatmul.mubr.f32.gmra.mxu0 %v1494
        %v1726 = vpop.f32.mrf.mxu0
        %v1727 = vadd.f32 %v1581, %v1726
        %v1728 = vpop.f32.mrf.mxu0
        %v1729 = vadd.f32 %v1585, %v1728
        %1730 = vmatprep.mubr.f32.mxu0 %v1497
        %1731 = vmatmul.mubr.f32.gmra.mxu0 %v1496
        %v1732 = vpop.f32.mrf.mxu0
        %v1733 = vadd.f32 %v1581, %v1732
        %v1734 = vpop.f32.mrf.mxu0
        %v1735 = vadd.f32 %v1585, %v1734
        %1736 = vmatprep.mubr.f32.mxu0 %v1499
        %1737 = vmatmul.mubr.f32.gmra.mxu0 %v1498
        %v1738 = vpop.f32.mrf.mxu0
        %v1739 = vadd.f32 %v1581, %v1738
        %v1740 = vpop.f32.mrf.mxu0
        %v1741 = vadd.f32 %v1585, %v1740
        %1742 = vmatprep.mubr.f32.mxu0 %v1501
        %1743 = vmatmul.mubr.f32.gmra.mxu0 %v1500
        %v1744 = vpop.f32.mrf.mxu0
        %v1745 = vadd.f32 %v1581, %v1744
        %v1746 = vpop.f32.mrf.mxu0
        %v1747 = vadd.f32 %v1585, %v1746
        %1748 = vmatprep.mubr.f32.mxu0 %v1503
        %1749 = vmatmul.mubr.f32.gmra.mxu0 %v1502
        %v1750 = vpop.f32.mrf.mxu0
        %v1751 = vadd.f32 %v1581, %v1750
        %v1752 = vpop.f32.mrf.mxu0
        %v1753 = vadd.f32 %v1585, %v1752
        %1754 = vmatprep.mubr.f32.mxu0 %v1505
        %1755 = vmatmul.mubr.f32.gmra.mxu0 %v1504
        %v1756 = vpop.f32.mrf.mxu0
        %v1757 = vadd.f32 %v1581, %v1756
        %v1758 = vpop.f32.mrf.mxu0
        %v1759 = vadd.f32 %v1585, %v1758
        %1760 = vmatprep.mubr.f32.mxu0 %v1507
        %1761 = vmatmul.mubr.f32.gmra.mxu0 %v1506
        %v1762 = vpop.f32.mrf.mxu0
        %v1763 = vadd.f32 %v1581, %v1762
        %v1764 = vpop.f32.mrf.mxu0
        %v1765 = vadd.f32 %v1585, %v1764
        %1766 = vmatprep.mubr.f32.mxu0 %v1509
        %1767 = vmatmul.mubr.f32.gmra.mxu0 %v1508
        %v1768 = vpop.f32.mrf.mxu0
        %v1769 = vadd.f32 %v1581, %v1768
        %v1770 = vpop.f32.mrf.mxu0
        %v1771 = vadd.f32 %v1585, %v1770
        %1772 = vmatprep.mubr.f32.mxu0 %v1511
        %1773 = vmatmul.mubr.f32.gmra.mxu0 %v1510
        %v1774 = vpop.f32.mrf.mxu0
        %v1775 = vadd.f32 %v1581, %v1774
        %v1776 = vpop.f32.mrf.mxu0
        %v1777 = vadd.f32 %v1585, %v1776
        %1778 = vdwg.mxu0
        %v1779 = vtanh.pop %v1655
        %v1780 = vtanh.pop %v1657
        %v1781 = vtanh.pop %v1661
        %v1782 = vtanh.pop %v1663
        %v1783 = vtanh.pop %v1667
        %v1784 = vtanh.pop %v1669
        %v1785 = vtanh.pop %v1673
        %v1786 = vtanh.pop %v1675
        %v1787 = vtanh.pop %v1679
        %v1788 = vtanh.pop %v1681
        %v1789 = vtanh.pop %v1685
        %v1790 = vtanh.pop %v1687
        %v1791 = vtanh.pop %v1691
        %v1792 = vtanh.pop %v1693
        %v1793 = vtanh.pop %v1697
        %v1794 = vtanh.pop %v1699
        %v1795 = vtanh.pop %v1703
        %v1796 = vtanh.pop %v1705
        %v1797 = vtanh.pop %v1709
        %v1798 = vtanh.pop %v1711
        %v1799 = vtanh.pop %v1715
        %v1800 = vtanh.pop %v1717
        %v1801 = vtanh.pop %v1721
        %v1802 = vtanh.pop %v1723
        %v1803 = vtanh.pop %v1727
        %v1804 = vtanh.pop %v1729
        %v1805 = vtanh.pop %v1733
        %v1806 = vtanh.pop %v1735
        %v1807 = vtanh.pop %v1739
        %v1808 = vtanh.pop %v1741
        %v1809 = vtanh.pop %v1745
        %v1810 = vtanh.pop %v1747
        %v1811 = vtanh.pop %v1751
        %v1812 = vtanh.pop %v1753
        %v1813 = vtanh.pop %v1757
        %v1814 = vtanh.pop %v1759
        %v1815 = vtanh.pop %v1763
        %v1816 = vtanh.pop %v1765
        %v1817 = vtanh.pop %v1769
        %v1818 = vtanh.pop %v1771
        %v1819 = vtanh.pop %v1775
        %v1820 = vtanh.pop %v1777
        %v1821 = vadd.f32 %v1779, %v980
        %v1822 = vadd.f32 %v1780, %v981
        %v1823 = vadd.f32 %v1781, %v982
        %v1824 = vadd.f32 %v1782, %v983
        %v1825 = vadd.f32 %v1783, %v984
        %v1826 = vadd.f32 %v1784, %v985
        %v1827 = vadd.f32 %v1785, %v986
        %v1828 = vadd.f32 %v1786, %v987
        %v1829 = vadd.f32 %v1787, %v988
        %v1830 = vadd.f32 %v1788, %v989
        %v1831 = vadd.f32 %v1789, %v990
        %v1832 = vadd.f32 %v1790, %v991
        %v1833 = vadd.f32 %v1791, %v992
        %v1834 = vadd.f32 %v1792, %v993
        %v1835 = vadd.f32 %v1793, %v994
        %v1836 = vadd.f32 %v1794, %v995
        %v1837 = vadd.f32 %v1795, %v996
        %v1838 = vadd.f32 %v1796, %v997
        %v1839 = vadd.f32 %v1797, %v998
        %v1840 = vadd.f32 %v1798, %v999
        %v1841 = vadd.f32 %v1799, %v1000
        %v1842 = vadd.f32 %v1800, %v1001
        %v1843 = vadd.f32 %v1801, %v1002
        %v1844 = vadd.f32 %v1802, %v1003
        %v1845 = vadd.f32 %v1803, %v1004
        %v1846 = vadd.f32 %v1804, %v1005
        %v1847 = vadd.f32 %v1805, %v1006
        %v1848 = vadd.f32 %v1806, %v1007
        %v1849 = vadd.f32 %v1807, %v1008
        %v1850 = vadd.f32 %v1808, %v1009
        %v1851 = vadd.f32 %v1809, %v1010
        %v1852 = vadd.f32 %v1810, %v1011
        %v1853 = vadd.f32 %v1811, %v1012
        %v1854 = vadd.f32 %v1812, %v1013
        %v1855 = vadd.f32 %v1813, %v1014
        %v1856 = vadd.f32 %v1814, %v1015
        %v1857 = vadd.f32 %v1815, %v1016
        %v1858 = vadd.f32 %v1816, %v1017
        %v1859 = vadd.f32 %v1817, %v1018
        %v1860 = vadd.f32 %v1818, %v1019
        %v1861 = vadd.f32 %v1819, %v1020
        %v1862 = vadd.f32 %v1820, %v1021
        %v1863 = vld [vmem:[%s8] sm:$0xff]
        %v1864 = vld [vmem:[%s8 + $0x8] sm:$0xff]
        %v1865 = vld [vmem:[%s8 + $0x10] sm:$0xff]
        %v1866 = vld [vmem:[%s8 + $0x18] sm:$0xff]
        %v1867 = vld [vmem:[%s8 + $0x20] sm:$0xff]
        %v1868 = vld [vmem:[%s8 + $0x28] sm:$0xff]
        %v1869 = vld [vmem:[%s8 + $0x30] sm:$0xff]
        %v1870 = vld [vmem:[%s8 + $0x38] sm:$0xff]
        %v1871 = vld [vmem:[%s8 + $0x40] sm:$0xff]
        %v1872 = vld [vmem:[%s8 + $0x48] sm:$0xff]
        %v1873 = vld [vmem:[%s8 + $0x50] sm:$0xff]
        %v1874 = vld [vmem:[%s8 + $0x58] sm:$0xff]
        %v1875 = vld [vmem:[%s8 + $0x60] sm:$0xff]
        %v1876 = vld [vmem:[%s8 + $0x68] sm:$0xff]
        %v1877 = vld [vmem:[%s8 + $0x70] sm:$0xff]
        %v1878 = vld [vmem:[%s8 + $0x78] sm:$0xff]
        %v1879 = vld [vmem:[%s8 + $0x80] sm:$0xff]
        %v1880 = vld [vmem:[%s8 + $0x88] sm:$0xff]
        %v1881 = vld [vmem:[%s8 + $0x90] sm:$0xff]
        %v1882 = vld [vmem:[%s8 + $0x98] sm:$0xff]
        %v1883 = vld [vmem:[%s8 + $0xa0] sm:$0xff]
        %v1884 = vld [vmem:[%s8 + $0xa8] sm:$0xff]
        %v1885 = vld [vmem:[%s8 + $0xb0] sm:$0xff]
        %v1886 = vld [vmem:[%s8 + $0xb8] sm:$0xff]
        %v1887 = vld [vmem:[%s8 + $0xc0] sm:$0xff]
        %v1888 = vld [vmem:[%s8 + $0xc8] sm:$0xff]
        %v1889 = vld [vmem:[%s8 + $0xd0] sm:$0xff]
        %v1890 = vld [vmem:[%s8 + $0xd8] sm:$0xff]
        %v1891 = vld [vmem:[%s8 + $0xe0] sm:$0xff]
        %v1892 = vld [vmem:[%s8 + $0xe8] sm:$0xff]
        %v1893 = vld [vmem:[%s8 + $0xf0] sm:$0xff]
        %v1894 = vld [vmem:[%s8 + $0xf8] sm:$0xff]
        %v1895 = vld [vmem:[%s9] sm:$0xff]
        %1896 = vmatprep.subr.mxu0 0.0
        %1897 = vmatpush1.msra.mxu0 0.0
        %1898 = vmatprep.subr.mxu0 0.0
        %1899 = vmatpush1.msra.mxu0 0.0
        %1900 = vmatprep.subr.mxu0 0.0
        %1901 = vmatpush1.msra.mxu0 0.0
        %1902 = vmatprep.subr.mxu0 0.0
        %1903 = vmatpush1.msra.mxu0 0.0
        %1904 = vmatprep.subr.mxu0 0.0
        %1905 = vmatpush1.msra.mxu0 0.0
        %1906 = vmatprep.subr.mxu0 0.0
        %1907 = vmatpush1.msra.mxu0 0.0
        %1908 = vmatprep.subr.mxu0 0.0
        %1909 = vmatpush1.msra.mxu0 0.0
        %1910 = vmatprep.subr.mxu0 0.0
        %1911 = vmatpush1.msra.mxu0 0.0
        %1912 = vmatprep.subr.mxu0 0.0
        %1913 = vmatpush1.msra.mxu0 0.0
        %1914 = vmatprep.subr.mxu0 0.0
        %1915 = vmatpush1.msra.mxu0 0.0
        %1916 = vmatprep.subr.mxu0 0.0
        %1917 = vmatpush1.msra.mxu0 0.0
        %1918 = vmatprep.subr.mxu0 0.0
        %1919 = vmatpush1.msra.mxu0 0.0
        %1920 = vmatprep.subr.mxu0 0.0
        %1921 = vmatpush1.msra.mxu0 0.0
        %1922 = vmatprep.subr.mxu0 0.0
        %1923 = vmatpush1.msra.mxu0 0.0
        %1924 = vmatprep.subr.mxu0 0.0
        %1925 = vmatpush1.msra.mxu0 0.0
        %1926 = vmatprep.subr.mxu0 0.0
        %1927 = vmatpush1.msra.mxu0 %v1895
        %1928 = vmatprep.subr.mxu0 0.0
        %1929 = vmatpush2.msra.mxu0 0.0
        %1930 = vmatprep.subr.mxu0 0.0
        %1931 = vmatpush2.msra.mxu0 0.0
        %1932 = vmatprep.subr.mxu0 0.0
        %1933 = vmatpush2.msra.mxu0 0.0
        %1934 = vmatprep.subr.mxu0 0.0
        %1935 = vmatpush2.msra.mxu0 0.0
        %1936 = vmatprep.subr.mxu0 0.0
        %1937 = vmatpush2.msra.mxu0 0.0
        %1938 = vmatprep.subr.mxu0 0.0
        %1939 = vmatpush2.msra.mxu0 0.0
        %1940 = vmatprep.subr.mxu0 0.0
        %1941 = vmatpush2.msra.mxu0 0.0
        %1942 = vmatprep.subr.mxu0 0.0
        %1943 = vmatpush2.msra.mxu0 0.0
        %1944 = vmatprep.subr.mxu0 0.0
        %1945 = vmatpush2.msra.mxu0 0.0
        %1946 = vmatprep.subr.mxu0 0.0
        %1947 = vmatpush2.msra.mxu0 0.0
        %1948 = vmatprep.subr.mxu0 0.0
        %1949 = vmatpush2.msra.mxu0 0.0
        %1950 = vmatprep.subr.mxu0 0.0
        %1951 = vmatpush2.msra.mxu0 0.0
        %1952 = vmatprep.subr.mxu0 0.0
        %1953 = vmatpush2.msra.mxu0 0.0
        %1954 = vmatprep.subr.mxu0 0.0
        %1955 = vmatpush2.msra.mxu0 0.0
        %1956 = vmatprep.subr.mxu0 0.0
        %1957 = vmatpush2.msra.mxu0 0.0
        %1958 = vmatprep.subr.mxu0 0.0
        %1959 = vmatpush2.msra.mxu0 0.0
        %1960 = vmatprep.mubr.f32.mxu0 0.0
        %1961 = vmatmul.mubr.f32.gmra.mxu0 %v418
        %v1962 = vpop.f32.mrf.mxu0
        %v1963 = vadd.f32 0.0, %v1962
        %v1964 = vpop.f32.mrf.mxu0
        %1965 = vmatprep.mubr.f32.mxu0 0.0
        %1966 = vmatmul.mubr.f32.gmra.mxu0 %v421
        %v1967 = vpop.f32.mrf.mxu0
        %v1968 = vadd.f32 0.0, %v1967
        %v1969 = vpop.f32.mrf.mxu0
        %1970 = vmatprep.mubr.f32.mxu0 0.0
        %1971 = vmatmul.mubr.f32.gmra.mxu0 %v424
        %v1972 = vpop.f32.mrf.mxu0
        %v1973 = vadd.f32 0.0, %v1972
        %v1974 = vpop.f32.mrf.mxu0
        %1975 = vmatprep.mubr.f32.mxu0 0.0
        %1976 = vmatmul.mubr.f32.gmra.mxu0 %v427
        %v1977 = vpop.f32.mrf.mxu0
        %v1978 = vadd.f32 0.0, %v1977
        %v1979 = vpop.f32.mrf.mxu0
        %1980 = vmatprep.mubr.f32.mxu0 0.0
        %1981 = vmatmul.mubr.f32.gmra.mxu0 %v430
        %v1982 = vpop.f32.mrf.mxu0
        %v1983 = vadd.f32 0.0, %v1982
        %v1984 = vpop.f32.mrf.mxu0
        %1985 = vmatprep.mubr.f32.mxu0 0.0
        %1986 = vmatmul.mubr.f32.gmra.mxu0 %v433
        %v1987 = vpop.f32.mrf.mxu0
        %v1988 = vadd.f32 0.0, %v1987
        %v1989 = vpop.f32.mrf.mxu0
        %1990 = vmatprep.mubr.f32.mxu0 0.0
        %1991 = vmatmul.mubr.f32.gmra.mxu0 %v436
        %v1992 = vpop.f32.mrf.mxu0
        %v1993 = vadd.f32 0.0, %v1992
        %v1994 = vpop.f32.mrf.mxu0
        %1995 = vmatprep.mubr.f32.mxu0 0.0
        %1996 = vmatmul.mubr.f32.gmra.mxu0 %v439
        %v1997 = vpop.f32.mrf.mxu0
        %v1998 = vadd.f32 0.0, %v1997
        %v1999 = vpop.f32.mrf.mxu0
        %2000 = vmatprep.mubr.f32.mxu0 0.0
        %2001 = vmatmul.mubr.f32.gmra.mxu0 %v442
        %v2002 = vpop.f32.mrf.mxu0
        %v2003 = vadd.f32 0.0, %v2002
        %v2004 = vpop.f32.mrf.mxu0
        %2005 = vmatprep.mubr.f32.mxu0 0.0
        %2006 = vmatmul.mubr.f32.gmra.mxu0 %v445
        %v2007 = vpop.f32.mrf.mxu0
        %v2008 = vadd.f32 0.0, %v2007
        %v2009 = vpop.f32.mrf.mxu0
        %2010 = vmatprep.mubr.f32.mxu0 0.0
        %2011 = vmatmul.mubr.f32.gmra.mxu0 %v448
        %v2012 = vpop.f32.mrf.mxu0
        %v2013 = vadd.f32 0.0, %v2012
        %v2014 = vpop.f32.mrf.mxu0
        %2015 = vmatprep.mubr.f32.mxu0 0.0
        %2016 = vmatmul.mubr.f32.gmra.mxu0 %v451
        %v2017 = vpop.f32.mrf.mxu0
        %v2018 = vadd.f32 0.0, %v2017
        %v2019 = vpop.f32.mrf.mxu0
        %2020 = vmatprep.mubr.f32.mxu0 0.0
        %2021 = vmatmul.mubr.f32.gmra.mxu0 %v454
        %v2022 = vpop.f32.mrf.mxu0
        %v2023 = vadd.f32 0.0, %v2022
        %v2024 = vpop.f32.mrf.mxu0
        %2025 = vmatprep.mubr.f32.mxu0 0.0
        %2026 = vmatmul.mubr.f32.gmra.mxu0 %v457
        %v2027 = vpop.f32.mrf.mxu0
        %v2028 = vadd.f32 0.0, %v2027
        %v2029 = vpop.f32.mrf.mxu0
        %2030 = vmatprep.mubr.f32.mxu0 0.0
        %2031 = vmatmul.mubr.f32.gmra.mxu0 %v460
        %v2032 = vpop.f32.mrf.mxu0
        %v2033 = vadd.f32 0.0, %v2032
        %v2034 = vpop.f32.mrf.mxu0
        %2035 = vmatprep.mubr.f32.mxu0 0.0
        %2036 = vmatmul.mubr.f32.gmra.mxu0 %v463
        %v2037 = vpop.f32.mrf.mxu0
        %v2038 = vadd.f32 0.0, %v2037
        %v2039 = vpop.f32.mrf.mxu0
        %2040 = vmatprep.mubr.f32.mxu0 0.0
        %2041 = vmatmul.mubr.f32.gmra.mxu0 %v466
        %v2042 = vpop.f32.mrf.mxu0
        %v2043 = vadd.f32 0.0, %v2042
        %v2044 = vpop.f32.mrf.mxu0
        %2045 = vmatprep.mubr.f32.mxu0 0.0
        %2046 = vmatmul.mubr.f32.gmra.mxu0 %v469
        %v2047 = vpop.f32.mrf.mxu0
        %v2048 = vadd.f32 0.0, %v2047
        %v2049 = vpop.f32.mrf.mxu0
        %2050 = vmatprep.mubr.f32.mxu0 0.0
        %2051 = vmatmul.mubr.f32.gmra.mxu0 %v472
        %v2052 = vpop.f32.mrf.mxu0
        %v2053 = vadd.f32 0.0, %v2052
        %v2054 = vpop.f32.mrf.mxu0
        %2055 = vmatprep.mubr.f32.mxu0 0.0
        %2056 = vmatmul.mubr.f32.gmra.mxu0 %v475
        %v2057 = vpop.f32.mrf.mxu0
        %v2058 = vadd.f32 0.0, %v2057
        %v2059 = vpop.f32.mrf.mxu0
        %2060 = vmatprep.mubr.f32.mxu0 0.0
        %2061 = vmatmul.mubr.f32.gmra.mxu0 %v478
        %v2062 = vpop.f32.mrf.mxu0
        %v2063 = vadd.f32 0.0, %v2062
        %v2064 = vpop.f32.mrf.mxu0
        %2065 = vdwg.mxu0
        %2066 = vmatprep.subr.mxu0 0.0
        %2067 = vmatpush1.msra.mxu0 %v1878
        %2068 = vmatprep.subr.mxu0 0.0
        %2069 = vmatpush1.msra.mxu0 %v1877
        %2070 = vmatprep.subr.mxu0 0.0
        %2071 = vmatpush1.msra.mxu0 %v1876
        %2072 = vmatprep.subr.mxu0 0.0
        %2073 = vmatpush1.msra.mxu0 %v1875
        %2074 = vmatprep.subr.mxu0 0.0
        %2075 = vmatpush1.msra.mxu0 %v1874
        %2076 = vmatprep.subr.mxu0 0.0
        %2077 = vmatpush1.msra.mxu0 %v1873
        %2078 = vmatprep.subr.mxu0 0.0
        %2079 = vmatpush1.msra.mxu0 %v1872
        %2080 = vmatprep.subr.mxu0 0.0
        %2081 = vmatpush1.msra.mxu0 %v1871
        %2082 = vmatprep.subr.mxu0 0.0
        %2083 = vmatpush1.msra.mxu0 %v1870
        %2084 = vmatprep.subr.mxu0 0.0
        %2085 = vmatpush1.msra.mxu0 %v1869
        %2086 = vmatprep.subr.mxu0 0.0
        %2087 = vmatpush1.msra.mxu0 %v1868
        %2088 = vmatprep.subr.mxu0 0.0
        %2089 = vmatpush1.msra.mxu0 %v1867
        %2090 = vmatprep.subr.mxu0 0.0
        %2091 = vmatpush1.msra.mxu0 %v1866
        %2092 = vmatprep.subr.mxu0 0.0
        %2093 = vmatpush1.msra.mxu0 %v1865
        %2094 = vmatprep.subr.mxu0 0.0
        %2095 = vmatpush1.msra.mxu0 %v1864
        %2096 = vmatprep.subr.mxu0 0.0
        %2097 = vmatpush1.msra.mxu0 %v1863
        %2098 = vmatprep.subr.mxu0 0.0
        %2099 = vmatpush2.msra.mxu0 %v1894
        %2100 = vmatprep.subr.mxu0 0.0
        %2101 = vmatpush2.msra.mxu0 %v1893
        %2102 = vmatprep.subr.mxu0 0.0
        %2103 = vmatpush2.msra.mxu0 %v1892
        %2104 = vmatprep.subr.mxu0 0.0
        %2105 = vmatpush2.msra.mxu0 %v1891
        %2106 = vmatprep.subr.mxu0 0.0
        %2107 = vmatpush2.msra.mxu0 %v1890
        %2108 = vmatprep.subr.mxu0 0.0
        %2109 = vmatpush2.msra.mxu0 %v1889
        %2110 = vmatprep.subr.mxu0 0.0
        %2111 = vmatpush2.msra.mxu0 %v1888
        %2112 = vmatprep.subr.mxu0 0.0
        %2113 = vmatpush2.msra.mxu0 %v1887
        %2114 = vmatprep.subr.mxu0 0.0
        %2115 = vmatpush2.msra.mxu0 %v1886
        %2116 = vmatprep.subr.mxu0 0.0
        %2117 = vmatpush2.msra.mxu0 %v1885
        %2118 = vmatprep.subr.mxu0 0.0
        %2119 = vmatpush2.msra.mxu0 %v1884
        %2120 = vmatprep.subr.mxu0 0.0
        %2121 = vmatpush2.msra.mxu0 %v1883
        %2122 = vmatprep.subr.mxu0 0.0
        %2123 = vmatpush2.msra.mxu0 %v1882
        %2124 = vmatprep.subr.mxu0 0.0
        %2125 = vmatpush2.msra.mxu0 %v1881
        %2126 = vmatprep.subr.mxu0 0.0
        %2127 = vmatpush2.msra.mxu0 %v1880
        %2128 = vmatprep.subr.mxu0 0.0
        %2129 = vmatpush2.msra.mxu0 %v1879
        %2130 = vmatprep.mubr.f32.mxu0 %v1822
        %2131 = vmatmul.mubr.f32.gmra.mxu0 %v1821
        %v2132 = vpop.f32.mrf.mxu0
        %v2133 = vadd.f32 %v1963, %v2132
        %v2134 = vpop.f32.mrf.mxu0
        %2135 = vmatprep.mubr.f32.mxu0 %v1824
        %2136 = vmatmul.mubr.f32.gmra.mxu0 %v1823
        %v2137 = vpop.f32.mrf.mxu0
        %v2138 = vadd.f32 %v1968, %v2137
        %v2139 = vpop.f32.mrf.mxu0
        %2140 = vmatprep.mubr.f32.mxu0 %v1826
        %2141 = vmatmul.mubr.f32.gmra.mxu0 %v1825
        %v2142 = vpop.f32.mrf.mxu0
        %v2143 = vadd.f32 %v1973, %v2142
        %v2144 = vpop.f32.mrf.mxu0
        %2145 = vmatprep.mubr.f32.mxu0 %v1828
        %2146 = vmatmul.mubr.f32.gmra.mxu0 %v1827
        %v2147 = vpop.f32.mrf.mxu0
        %v2148 = vadd.f32 %v1978, %v2147
        %v2149 = vpop.f32.mrf.mxu0
        %2150 = vmatprep.mubr.f32.mxu0 %v1830
        %2151 = vmatmul.mubr.f32.gmra.mxu0 %v1829
        %v2152 = vpop.f32.mrf.mxu0
        %v2153 = vadd.f32 %v1983, %v2152
        %v2154 = vpop.f32.mrf.mxu0
        %2155 = vmatprep.mubr.f32.mxu0 %v1832
        %2156 = vmatmul.mubr.f32.gmra.mxu0 %v1831
        %v2157 = vpop.f32.mrf.mxu0
        %v2158 = vadd.f32 %v1988, %v2157
        %v2159 = vpop.f32.mrf.mxu0
        %2160 = vmatprep.mubr.f32.mxu0 %v1834
        %2161 = vmatmul.mubr.f32.gmra.mxu0 %v1833
        %v2162 = vpop.f32.mrf.mxu0
        %v2163 = vadd.f32 %v1993, %v2162
        %v2164 = vpop.f32.mrf.mxu0
        %2165 = vmatprep.mubr.f32.mxu0 %v1836
        %2166 = vmatmul.mubr.f32.gmra.mxu0 %v1835
        %v2167 = vpop.f32.mrf.mxu0
        %v2168 = vadd.f32 %v1998, %v2167
        %v2169 = vpop.f32.mrf.mxu0
        %2170 = vmatprep.mubr.f32.mxu0 %v1838
        %2171 = vmatmul.mubr.f32.gmra.mxu0 %v1837
        %v2172 = vpop.f32.mrf.mxu0
        %v2173 = vadd.f32 %v2003, %v2172
        %v2174 = vpop.f32.mrf.mxu0
        %2175 = vmatprep.mubr.f32.mxu0 %v1840
        %2176 = vmatmul.mubr.f32.gmra.mxu0 %v1839
        %v2177 = vpop.f32.mrf.mxu0
        %v2178 = vadd.f32 %v2008, %v2177
        %v2179 = vpop.f32.mrf.mxu0
        %2180 = vmatprep.mubr.f32.mxu0 %v1842
        %2181 = vmatmul.mubr.f32.gmra.mxu0 %v1841
        %v2182 = vpop.f32.mrf.mxu0
        %v2183 = vadd.f32 %v2013, %v2182
        %v2184 = vpop.f32.mrf.mxu0
        %2185 = vmatprep.mubr.f32.mxu0 %v1844
        %2186 = vmatmul.mubr.f32.gmra.mxu0 %v1843
        %v2187 = vpop.f32.mrf.mxu0
        %v2188 = vadd.f32 %v2018, %v2187
        %v2189 = vpop.f32.mrf.mxu0
        %2190 = vmatprep.mubr.f32.mxu0 %v1846
        %2191 = vmatmul.mubr.f32.gmra.mxu0 %v1845
        %v2192 = vpop.f32.mrf.mxu0
        %v2193 = vadd.f32 %v2023, %v2192
        %v2194 = vpop.f32.mrf.mxu0
        %2195 = vmatprep.mubr.f32.mxu0 %v1848
        %2196 = vmatmul.mubr.f32.gmra.mxu0 %v1847
        %v2197 = vpop.f32.mrf.mxu0
        %v2198 = vadd.f32 %v2028, %v2197
        %v2199 = vpop.f32.mrf.mxu0
        %2200 = vmatprep.mubr.f32.mxu0 %v1850
        %2201 = vmatmul.mubr.f32.gmra.mxu0 %v1849
        %v2202 = vpop.f32.mrf.mxu0
        %v2203 = vadd.f32 %v2033, %v2202
        %v2204 = vpop.f32.mrf.mxu0
        %2205 = vmatprep.mubr.f32.mxu0 %v1852
        %2206 = vmatmul.mubr.f32.gmra.mxu0 %v1851
        %v2207 = vpop.f32.mrf.mxu0
        %v2208 = vadd.f32 %v2038, %v2207
        %v2209 = vpop.f32.mrf.mxu0
        %2210 = vmatprep.mubr.f32.mxu0 %v1854
        %2211 = vmatmul.mubr.f32.gmra.mxu0 %v1853
        %v2212 = vpop.f32.mrf.mxu0
        %v2213 = vadd.f32 %v2043, %v2212
        %v2214 = vpop.f32.mrf.mxu0
        %2215 = vmatprep.mubr.f32.mxu0 %v1856
        %2216 = vmatmul.mubr.f32.gmra.mxu0 %v1855
        %v2217 = vpop.f32.mrf.mxu0
        %v2218 = vadd.f32 %v2048, %v2217
        %v2219 = vpop.f32.mrf.mxu0
        %2220 = vmatprep.mubr.f32.mxu0 %v1858
        %2221 = vmatmul.mubr.f32.gmra.mxu0 %v1857
        %v2222 = vpop.f32.mrf.mxu0
        %v2223 = vadd.f32 %v2053, %v2222
        %v2224 = vpop.f32.mrf.mxu0
        %2225 = vmatprep.mubr.f32.mxu0 %v1860
        %2226 = vmatmul.mubr.f32.gmra.mxu0 %v1859
        %v2227 = vpop.f32.mrf.mxu0
        %v2228 = vadd.f32 %v2058, %v2227
        %v2229 = vpop.f32.mrf.mxu0
        %2230 = vmatprep.mubr.f32.mxu0 %v1862
        %2231 = vmatmul.mubr.f32.gmra.mxu0 %v1861
        %v2232 = vpop.f32.mrf.mxu0
        %v2233 = vadd.f32 %v2063, %v2232
        %v2234 = vpop.f32.mrf.mxu0
        %2235 = vdwg.mxu0
        %vm2236 = vcmask 31744
        %2237 = vst.msk [vmem:[%s391] sm:$0xff] %vm2236, %v2133
        %2238 = vst.msk [vmem:[%s391 + $0x8] sm:$0xff] %vm2236, %v2138
        %2239 = vst.msk [vmem:[%s391 + $0x10] sm:$0xff] %vm2236, %v2143
        %2240 = vst.msk [vmem:[%s391 + $0x18] sm:$0xff] %vm2236, %v2148
        %2241 = vst.msk [vmem:[%s391 + $0x20] sm:$0xff] %vm2236, %v2153
        %2242 = vst.msk [vmem:[%s391 + $0x28] sm:$0xff] %vm2236, %v2158
        %2243 = vst.msk [vmem:[%s391 + $0x30] sm:$0xff] %vm2236, %v2163
        %2244 = vst.msk [vmem:[%s391 + $0x38] sm:$0xff] %vm2236, %v2168
        %2245 = vst.msk [vmem:[%s391 + $0x40] sm:$0xff] %vm2236, %v2173
        %2246 = vst.msk [vmem:[%s391 + $0x48] sm:$0xff] %vm2236, %v2178
        %2247 = vst.msk [vmem:[%s391 + $0x50] sm:$0xff] %vm2236, %v2183
        %2248 = vst.msk [vmem:[%s391 + $0x58] sm:$0xff] %vm2236, %v2188
        %2249 = vst.msk [vmem:[%s391 + $0x60] sm:$0xff] %vm2236, %v2193
        %2250 = vst.msk [vmem:[%s391 + $0x68] sm:$0xff] %vm2236, %v2198
        %2251 = vst.msk [vmem:[%s391 + $0x70] sm:$0xff] %vm2236, %v2203
        %2252 = vst.msk [vmem:[%s391 + $0x78] sm:$0xff] %vm2236, %v2208
        %2253 = vst.msk [vmem:[%s391 + $0x80] sm:$0xff] %vm2236, %v2213
        %2254 = vst.msk [vmem:[%s391 + $0x88] sm:$0xff] %vm2236, %v2218
        %2255 = vst.msk [vmem:[%s391 + $0x90] sm:$0xff] %vm2236, %v2223
        %2256 = vst.msk [vmem:[%s391 + $0x98] sm:$0xff] %vm2236, %v2228
        %2257 = vst.msk [vmem:[%s391 + $0xa0] sm:$0xff] %vm2236, %v2233
        %s2258 = smul.u32 21, %s23
        %p2259 = scmp.lt.s32.totalorder %s2258, 41
        %s2260 = scalar_select %p2259, %s2258, 41
        %s2261 = smul.addr %s2260, 8
        %s2262 = scalar_lea.vmem %s10, %s2261
        // Predicated region
        $region69: #{tpu_custom_call.1} parent=59 // pred_check
          %p2263 = pneg %p256
        $region70: #{tpu_custom_call.1} parent=59 // pred_check_branch
          %2265 = sbr.rel (%p2263) target = $region72
        $region71: #{tpu_custom_call.1} parent=59 // pred_region
          %s2266 = smul.u32 21, %s23
        $region72: #{tpu_custom_call.1} parent=59 // pred_fallthru
          _
      $region60: #{tpu_custom_call.1} parent=5 // pred_fallthru
        _
      %p2267 = scmp.le.s32.totalorder 2, %s18
      // Predicated region
      $region73: #{tpu_custom_call.1} parent=5 // pred_check
        %p2268 = pneg %p2267
      $region74: #{tpu_custom_call.1} parent=5 // pred_check_branch
        %2270 = sbr.rel (%p2268) target = $region76
      $region75: #{tpu_custom_call.1} parent=5 // pred_region
        %s2271 = ssub.s32 %s18, 2
        // Predicated region
        $region77: #{tpu_custom_call.1} parent=75 // pred_check
          %p2272 = pneg %p262
        $region78: #{tpu_custom_call.1} parent=75 // pred_check_branch
          %2274 = sbr.rel (%p2272) target = $region80
        $region79: #{tpu_custom_call.1} parent=75 // pred_region
          %s2275 = smul.u32 21, %s24
          %p2276 = scmp.lt.s32.totalorder %s2275, 41
          %s2277 = scalar_select %p2276, %s2275, 41
          %s2278 = smul.addr %s2277, 8
          %s2279 = scalar_lea.vmem %s10, %s2278
        $region80: #{tpu_custom_call.1} parent=75 // pred_fallthru
          _
      $region76: #{tpu_custom_call.1} parent=5 // pred_fallthru
        _
    $region6: #{tpu_custom_call.1} parent=1 // loop_footer
      %s22 = sadd.s32 1, %s18
    $region7: #{tpu_custom_call.1} parent=1 // loop_footer_branch
      %17 = sbr.rel target = $region3
    $region8: #{tpu_custom_call.1} parent=1 // loop_exit
      _
    %2280 = vsyncpa [#allocation3], 1
    %s2281 = scalar_lea.sflag [#allocation3], 1
    %2282 = vsyncpa %s2281, 1
    %2283 = vsyncpa [#allocation5], 1

</llo_original>
